<compile_context>
chip_gen: v7x
topology: tpu7x:2x2x1
jax: 0.10.0
libtpu: 0.0.40
codegen_flags: <defaults>
</compile_context>

<pallas_src>
import jax
import jax.numpy as jnp
from jax.experimental import pallas as pl
from jax.experimental.pallas import tpu as pltpu

D_IN = 128
D_PROJ = 256
D_ENC = 512
D_VAL = 128
LN_EPS = 1e-5

# PyTorch nn.GELU() defaults to exact erf.  The tanh approximation (single EUP
# push that overlaps MXU work) is used by default; flip to True for exact erf.
# TODO(synk): sign off on tanh-approx GELU vs. PyTorch's exact-erf default (~1e-3 deviation).
_EXACT_GELU = False

# bf16 elementwise for the two wide GELU stages (win on v6e/v7x bf16 VPU/EUP;
# set False on v5e, which has no bf16 vector/EUP path).
_BF16_ELEMENTWISE = True
_EW_DTYPE = jnp.bfloat16 if _BF16_ELEMENTWISE else jnp.float32


def _gelu(x):
    if _EXACT_GELU:
        x32 = x.astype(jnp.float32)
        y = 0.5 * x32 * (1.0 + jax.lax.erf(x32 * 0.7071067811865476))
        return y.astype(x.dtype)
    c = 0.7978845608028654  # sqrt(2/pi)
    return 0.5 * x * (1.0 + jnp.tanh(c * (x + 0.044715 * x * x * x)))


def _layernorm(x, gamma, beta):
    mu = jnp.mean(x, axis=-1, keepdims=True)
    xc = x - mu
    var = jnp.mean(xc * xc, axis=-1, keepdims=True)
    inv = jax.lax.rsqrt(var + LN_EPS)
    return xc * inv * gamma + beta


def _round_up(n, m):
    return ((n + m - 1) // m) * m


def _cdiv(a, b):
    return (a + b - 1) // b


def moral_policy_kernel(
    x_ref,                              # (eff_b, 128) f32 activations (cast to bf16 in-kernel)
    w1_ref, w2_ref, w3_ref, w4_ref,     # bf16 weights (w3 has the sigmoid gates folded in)
    v256_ref, v512_ref, v128_ref,       # packed f32 per-feature vectors
    score_ref,                          # (1, 1, eff_b) f32 lane-major score row
    enc_ref,                            # (eff_b, 256) constraint_applied
):
    # packed rows: v256 = [b1, ln1_gamma, ln1_beta, b3*gate]
    #              v512 = [b2, ln2_gamma, ln2_beta]
    #              v128 = [b4, w5_row, b5_row]
    b1, g1, be1, b3 = (v256_ref[i:i + 1, :] for i in range(4))
    b2, g2, be2 = (v512_ref[i:i + 1, :] for i in range(3))
    b4 = v128_ref[0:1, :]
    w5r = v128_ref[1:2, :]
    b5v = v128_ref[2:3, 0:1]            # (1, 1) scalar bias

    # Cast after the pipelined load (one VPU op hidden under the MXU) instead
    # of a separate host-side XLA cast pass over x.
    x = x_ref[...].astype(jnp.bfloat16)

    # input_projection: Linear(128,256) -> LayerNorm(256) -> GELU
    h = jnp.dot(x, w1_ref[...], preferred_element_type=jnp.float32) + b1
    h = _gelu(_layernorm(h, g1, be1).astype(_EW_DTYPE))      # bf16 GELU (wide stage)

    # ethical_encoder: Linear(256,512) -> LayerNorm(512) -> GELU -> Linear(512,256)
    e = jnp.dot(h.astype(jnp.bfloat16), w2_ref[...],
                preferred_element_type=jnp.float32) + b2
    e = _gelu(_layernorm(e, g2, be2).astype(_EW_DTYPE))      # bf16 GELU (wide stage)
    # safety_filters (two sigmoid gates) folded into w3/b3 on the host:
    #   (e @ w3 + b3) * g == e @ (w3 * g) + (b3 * g)   (exact)
    e = jnp.dot(e.astype(jnp.bfloat16), w3_ref[...],
                preferred_element_type=jnp.float32) + b3

    # value_head: Linear(256,128) -> GELU -> Linear(128,1) -> Tanh
    v = jnp.dot(e.astype(jnp.bfloat16), w4_ref[...],
                preferred_element_type=jnp.float32) + b4
    v = _gelu(v)

    # Final Linear(128,1) as a q@k.T-style MXU dot producing a *lane-major*
    # (., eff_b) result: tanh touches eff_b/128 vregs and the score writeback
    # is 4 B/row instead of a 512 B/row broadcast slab.
    w5m = jnp.broadcast_to(w5r, (8, D_VAL)).astype(jnp.bfloat16)   # tiny, MXU-friendly M=8
    s8 = jax.lax.dot_general(
        w5m, v.astype(jnp.bfloat16),
        dimension_numbers=(((1,), (1,)), ((), ())),
        preferred_element_type=jnp.float32)                        # (8, eff_b)
    s_row = jnp.tanh(s8[0:1, :] + b5v)                             # (1, eff_b)

    enc_ref[...] = e.astype(enc_ref.dtype)
    score_ref[0] = s_row.astype(score_ref.dtype)


def prepare_params(params):
    """Fold safety gates into w3/b3, pack small vectors, cast weights to bf16."""
    gate = jax.nn.sigmoid(params["c1"]) * jax.nn.sigmoid(params["c2"])  # (1, 256)
    w3f = params["w3"] * gate    # column-wise scaling; exact refactor of the gates
    b3f = params["b3"] * gate
    vec256 = jnp.concatenate([params["b1"], params["g1"], params["be1"], b3f], axis=0)
    vec512 = jnp.concatenate([params["b2"], params["g2"], params["be2"]], axis=0)
    vec128 = jnp.concatenate(
        [params["b4"], params["w5"].T, jnp.broadcast_to(params["b5"], (1, D_VAL))],
        axis=0)
    return {
        "w1": params["w1"].astype(jnp.bfloat16),
        "w2": params["w2"].astype(jnp.bfloat16),
        "w3": w3f.astype(jnp.bfloat16),
        "w4": params["w4"].astype(jnp.bfloat16),
        "vec256": vec256.astype(jnp.float32),
        "vec512": vec512.astype(jnp.float32),
        "vec128": vec128.astype(jnp.float32),
    }


def moral_policy_forward(x, prep, *, block_b=1024, enc_dtype=jnp.float32,
                         vmem_limit_bytes=None):
    """Fused forward.

    Tiling: balanced tiles (padding < 16 rows per tile) no larger than
    block_b, with >=2 tiles forced for B >= 32 so the 'parallel' grid axis can
    shard across both v7x TensorCores.  block_b=512..2048 is the sweet spot;
    on v5e set vmem_limit_bytes when sweeping block_b above ~1024."""
    B = x.shape[0]
    assert x.shape[1] == D_IN
    num_tiles = max(_cdiv(B, block_b), 2 if B >= 32 else 1)
    eff_b = _round_up(max(_cdiv(B, num_tiles), 1), 16)     # multiple of 16 (bf16 sublanes)
    padded_b = num_tiles * eff_b
    xp = x if padded_b == B else jnp.pad(x, ((0, padded_b - B), (0, 0)))

    param_order = ["w1", "w2", "w3", "w4", "vec256", "vec512", "vec128"]
    param_args = [prep[k] for k in param_order]
    # Constant operands total ~0.7 MiB (bf16 weights + small f32 vectors);
    # the default double-buffered full-shape BlockSpec cost is negligible.
    param_specs = [pl.BlockSpec(prep[k].shape, lambda i: (0, 0)) for k in param_order]

    compiler_params = pltpu.CompilerParams(
        # batch tiles are independent -> sharded across both v7x TensorCores
        # whenever the grid has >=2 steps; harmless on single-TC v5e/v6e.
        dimension_semantics=("parallel",),
        vmem_limit_bytes=vmem_limit_bytes,
    )

    score_pad, enc_pad = pl.pallas_call(
        moral_policy_kernel,
        out_shape=(
            jax.ShapeDtypeStruct((num_tiles, 1, eff_b), jnp.float32),  # lane-major scores
            jax.ShapeDtypeStruct((padded_b, D_PROJ), enc_dtype),
        ),
        grid_spec=pltpu.PrefetchScalarGridSpec(
            num_scalar_prefetch=0,
            grid=(num_tiles,),
            in_specs=[pl.BlockSpec((eff_b, D_IN), lambda i: (i, 0))] + param_specs,
            out_specs=[
                pl.BlockSpec((1, 1, eff_b), lambda i: (i, 0, 0)),
                pl.BlockSpec((eff_b, D_PROJ), lambda i: (i, 0)),
            ],
        ),
        compiler_params=compiler_params,
    )(xp, *param_args)

    return {
        "moral_score": score_pad.reshape(padded_b, 1)[:B],
        "constraint_applied": enc_pad[:B],
    }


def init_params(key):
    """Deterministic synthetic init (shapes match the PyTorch module)."""
    ks = jax.random.split(key, 10)

    def linear(k, fan_in, fan_out):
        kw, kb = jax.random.split(k)
        bound = 1.0 / jnp.sqrt(fan_in)
        w = jax.random.uniform(kw, (fan_in, fan_out), jnp.float32, -bound, bound)
        b = jax.random.uniform(kb, (1, fan_out), jnp.float32, -bound, bound)
        return w, b

    w1, b1 = linear(ks[0], D_IN, D_PROJ)
    w2, b2 = linear(ks[1], D_PROJ, D_ENC)
    w3, b3 = linear(ks[2], D_ENC, D_PROJ)
    w4, b4 = linear(ks[3], D_PROJ, D_VAL)
    w5, b5 = linear(ks[4], D_VAL, 1)

    return {
        "w1": w1, "b1": b1,
        "g1": jnp.ones((1, D_PROJ), jnp.float32), "be1": jnp.zeros((1, D_PROJ), jnp.float32),
        "w2": w2, "b2": b2,
        "g2": jnp.ones((1, D_ENC), jnp.float32), "be2": jnp.zeros((1, D_ENC), jnp.float32),
        "w3": w3, "b3": b3,
        "c1": jax.random.normal(ks[5], (1, D_PROJ), jnp.float32),
        "c2": jax.random.normal(ks[6], (1, D_PROJ), jnp.float32),
        "w4": w4, "b4": b4,
        "w5": w5, "b5": b5,
    }


def reference_forward_f32(x, p):
    """Pure-JAX f32 reference of the PyTorch forward (gates applied post-matmul)."""
    h = _gelu(_layernorm(x @ p["w1"] + p["b1"], p["g1"], p["be1"]))
    e = _gelu(_layernorm(h @ p["w2"] + p["b2"], p["g2"], p["be2"]))
    e = e @ p["w3"] + p["b3"]
    e = e * jax.nn.sigmoid(p["c1"]) * jax.nn.sigmoid(p["c2"])
    v = _gelu(e @ p["w4"] + p["b4"])
    s = jnp.tanh(v @ p["w5"] + p["b5"])
    return {"moral_score": s, "constraint_applied": e}


def reference_forward_bf16(x, prep):
    """Emulates the kernel's numerics (bf16 matmul operands, bf16 wide GELUs,
    folded gates, lane-major final dot)."""
    v256, v512, v128 = prep["vec256"], prep["vec512"], prep["vec128"]
    xb = x.astype(jnp.bfloat16)
    h = jnp.dot(xb, prep["w1"], preferred_element_type=jnp.float32) + v256[0:1]
    h = _gelu(_layernorm(h, v256[1:2], v256[2:3]).astype(_EW_DTYPE))
    e = jnp.dot(h.astype(jnp.bfloat16), prep["w2"],
                preferred_element_type=jnp.float32) + v512[0:1]
    e = _gelu(_layernorm(e, v512[1:2], v512[2:3]).astype(_EW_DTYPE))
    e = jnp.dot(e.astype(jnp.bfloat16), prep["w3"],
                preferred_element_type=jnp.float32) + v256[3:4]
    v = _gelu(jnp.dot(e.astype(jnp.bfloat16), prep["w4"],
                      preferred_element_type=jnp.float32) + v128[0:1])
    w5b = v128[1:2].astype(jnp.bfloat16)
    s = jax.lax.dot_general(w5b, v.astype(jnp.bfloat16),
                            dimension_numbers=(((1,), (1,)), ((), ())),
                            preferred_element_type=jnp.float32)       # (1, B)
    s = jnp.tanh(s + v128[2:3, 0:1]).T                                 # (B, 1)
    return {"moral_score": s, "constraint_applied": e}


if __name__ == "__main__":
    key = jax.random.PRNGKey(0)
    k_param, k_x = jax.random.split(key)

    params = init_params(k_param)
    prep = prepare_params(params)

    # Small deterministic example: batch=8, input_dim=128 (module spec).
    B = 8
    x = jax.random.normal(k_x, (B, D_IN), jnp.float32)

    out = jax.block_until_ready(moral_policy_forward(x, prep))
    assert out["moral_score"].shape == (B, 1)
    assert out["constraint_applied"].shape == (B, D_PROJ)

    ref_bf16 = reference_forward_bf16(x, prep)
    ref_f32 = reference_forward_f32(x, params)
    # tight vs. the kernel-emulating reference (same casts, f32 accumulation)
    assert jnp.allclose(out["moral_score"], ref_bf16["moral_score"], atol=2e-3, rtol=2e-3)
    assert jnp.allclose(out["constraint_applied"], ref_bf16["constraint_applied"], atol=2e-3, rtol=2e-3)
    # loose sanity check vs. the f32 reference (bf16 operands break tight matching)
    assert jnp.allclose(out["moral_score"], ref_f32["moral_score"], atol=8e-2, rtol=8e-2)
    assert jnp.allclose(out["constraint_applied"], ref_f32["constraint_applied"], atol=8e-2, rtol=8e-2)

    # Exercise the multi-step 'parallel' grid + balanced-padding path
    # (B=40, block_b=16 -> 3 tiles of 16 rows, 8 pad rows total).
    B2 = 40
    x2 = jax.random.normal(jax.random.PRNGKey(1), (B2, D_IN), jnp.float32)
    out2 = jax.block_until_ready(moral_policy_forward(x2, prep, block_b=16))
    ref2 = reference_forward_bf16(x2, prep)
    assert out2["moral_score"].shape == (B2, 1)
    assert out2["constraint_applied"].shape == (B2, D_PROJ)
    assert jnp.allclose(out2["moral_score"], ref2["moral_score"], atol=2e-3, rtol=2e-3)
    assert jnp.allclose(out2["constraint_applied"], ref2["constraint_applied"], atol=2e-3, rtol=2e-3)

    print("KERNEL_OK")
</pallas_src>

<mosaic_0001>
module attributes {stable_mosaic.version = 11 : i64} {
  func.func @moral_policy_kernel(%arg0: i32, %arg1: memref<16x128xf32, #tpu.memory_space<vmem>>, %arg2: memref<128x256xbf16, #tpu.memory_space<vmem>>, %arg3: memref<256x512xbf16, #tpu.memory_space<vmem>>, %arg4: memref<512x256xbf16, #tpu.memory_space<vmem>>, %arg5: memref<256x128xbf16, #tpu.memory_space<vmem>>, %arg6: memref<4x256xf32, #tpu.memory_space<vmem>>, %arg7: memref<3x512xf32, #tpu.memory_space<vmem>>, %arg8: memref<3x128xf32, #tpu.memory_space<vmem>>, %arg9: memref<1x1x16xf32, #tpu.memory_space<vmem>>, %arg10: memref<16x256xf32, #tpu.memory_space<vmem>>) attributes {dimension_semantics = [#tpu.dimension_semantics<parallel>], iteration_bounds = array<i64: 1>, scalar_prefetch = 0 : i64, scratch_operands = 0 : i64, tpu.core_type = #tpu.core_type<tc>, window_params = [{transform_indices = @transform_0, window_bounds = array<i64: 16, 128>}, {pipeline_mode = #tpu.pipeline_mode<synchronous>, transform_indices = @transform_1, window_bounds = array<i64: 128, 256>}, {pipeline_mode = #tpu.pipeline_mode<synchronous>, transform_indices = @transform_2, window_bounds = array<i64: 256, 512>}, {pipeline_mode = #tpu.pipeline_mode<synchronous>, transform_indices = @transform_3, window_bounds = array<i64: 512, 256>}, {pipeline_mode = #tpu.pipeline_mode<synchronous>, transform_indices = @transform_4, window_bounds = array<i64: 256, 128>}, {pipeline_mode = #tpu.pipeline_mode<synchronous>, transform_indices = @transform_5, window_bounds = array<i64: 4, 256>}, {pipeline_mode = #tpu.pipeline_mode<synchronous>, transform_indices = @transform_6, window_bounds = array<i64: 3, 512>}, {pipeline_mode = #tpu.pipeline_mode<synchronous>, transform_indices = @transform_7, window_bounds = array<i64: 3, 128>}, {transform_indices = @transform_8, window_bounds = array<i64: 1, 1, 16>}, {transform_indices = @transform_9, window_bounds = array<i64: 16, 256>}]} {
    %c0 = arith.constant 0 : index
    %c0_0 = arith.constant 0 : index
    %0 = vector.load %arg6[%c0, %c0_0] : memref<4x256xf32, #tpu.memory_space<vmem>>, vector<1x256xf32>
    %c1 = arith.constant 1 : index
    %c0_1 = arith.constant 0 : index
    %1 = vector.load %arg6[%c1, %c0_1] : memref<4x256xf32, #tpu.memory_space<vmem>>, vector<1x256xf32>
    %c2 = arith.constant 2 : index
    %c0_2 = arith.constant 0 : index
    %2 = vector.load %arg6[%c2, %c0_2] : memref<4x256xf32, #tpu.memory_space<vmem>>, vector<1x256xf32>
    %c3 = arith.constant 3 : index
    %c0_3 = arith.constant 0 : index
    %3 = vector.load %arg6[%c3, %c0_3] : memref<4x256xf32, #tpu.memory_space<vmem>>, vector<1x256xf32>
    %c0_4 = arith.constant 0 : index
    %c0_5 = arith.constant 0 : index
    %4 = vector.load %arg7[%c0_4, %c0_5] : memref<3x512xf32, #tpu.memory_space<vmem>>, vector<1x512xf32>
    %c1_6 = arith.constant 1 : index
    %c0_7 = arith.constant 0 : index
    %5 = vector.load %arg7[%c1_6, %c0_7] : memref<3x512xf32, #tpu.memory_space<vmem>>, vector<1x512xf32>
    %c2_8 = arith.constant 2 : index
    %c0_9 = arith.constant 0 : index
    %6 = vector.load %arg7[%c2_8, %c0_9] : memref<3x512xf32, #tpu.memory_space<vmem>>, vector<1x512xf32>
    %c0_10 = arith.constant 0 : index
    %c0_11 = arith.constant 0 : index
    %7 = vector.load %arg8[%c0_10, %c0_11] : memref<3x128xf32, #tpu.memory_space<vmem>>, vector<1x128xf32>
    %c1_12 = arith.constant 1 : index
    %c0_13 = arith.constant 0 : index
    %8 = vector.load %arg8[%c1_12, %c0_13] : memref<3x128xf32, #tpu.memory_space<vmem>>, vector<1x128xf32>
    %c2_14 = arith.constant 2 : index
    %c0_15 = arith.constant 0 : index
    %9 = vector.load %arg8[%c2_14, %c0_15] : memref<3x128xf32, #tpu.memory_space<vmem>>, vector<1x1xf32>
    %c0_16 = arith.constant 0 : index
    %c0_17 = arith.constant 0 : index
    %10 = vector.load %arg1[%c0_16, %c0_17] : memref<16x128xf32, #tpu.memory_space<vmem>>, vector<16x128xf32>
    %11 = arith.truncf %10 : vector<16x128xf32> to vector<16x128xbf16>
    %c0_18 = arith.constant 0 : index
    %c0_19 = arith.constant 0 : index
    %12 = vector.load %arg2[%c0_18, %c0_19] : memref<128x256xbf16, #tpu.memory_space<vmem>>, vector<128x256xbf16>
    %cst = arith.constant dense<0.000000e+00> : vector<16x256xf32>
    %13 = tpu.matmul %11, %12, %cst {dimension_numbers = #tpu.dot_dimension_numbers<[1], [0], [0], [1], [0, 0, 1, 1], [], []>} : vector<16x128xbf16>, vector<128x256xbf16>, vector<16x256xf32> -> vector<16x256xf32>
    %14 = vector.broadcast %0 : vector<1x256xf32> to vector<16x256xf32>
    %15 = arith.addf %13, %14 : vector<16x256xf32>
    %cst_20 = arith.constant dense<0.000000e+00> : vector<16xf32>
    %16 = vector.multi_reduction <add>, %15, %cst_20 [1] : vector<16x256xf32> to vector<16xf32>
    %17 = vector.shape_cast %16 : vector<16xf32> to vector<16x1xf32>
    %cst_21 = arith.constant 2.560000e+02 : f32
    %18 = vector.broadcast %cst_21 : f32 to vector<16x1xf32>
    %19 = arith.divf %17, %18 : vector<16x1xf32>
    %20 = vector.broadcast %19 : vector<16x1xf32> to vector<16x256xf32>
    %21 = arith.subf %15, %20 : vector<16x256xf32>
    %22 = arith.mulf %21, %21 : vector<16x256xf32>
    %cst_22 = arith.constant dense<0.000000e+00> : vector<16xf32>
    %23 = vector.multi_reduction <add>, %22, %cst_22 [1] : vector<16x256xf32> to vector<16xf32>
    %24 = vector.shape_cast %23 : vector<16xf32> to vector<16x1xf32>
    %cst_23 = arith.constant 2.560000e+02 : f32
    %25 = vector.broadcast %cst_23 : f32 to vector<16x1xf32>
    %26 = arith.divf %24, %25 : vector<16x1xf32>
    %cst_24 = arith.constant 9.99999974E-6 : f32
    %27 = vector.broadcast %cst_24 : f32 to vector<16x1xf32>
    %28 = arith.addf %26, %27 : vector<16x1xf32>
    %29 = math.rsqrt %28 : vector<16x1xf32>
    %30 = vector.broadcast %29 : vector<16x1xf32> to vector<16x256xf32>
    %31 = arith.mulf %21, %30 : vector<16x256xf32>
    %32 = vector.broadcast %1 : vector<1x256xf32> to vector<16x256xf32>
    %33 = arith.mulf %31, %32 : vector<16x256xf32>
    %34 = vector.broadcast %2 : vector<1x256xf32> to vector<16x256xf32>
    %35 = arith.addf %33, %34 : vector<16x256xf32>
    %36 = arith.truncf %35 : vector<16x256xf32> to vector<16x256xbf16>
    %cst_25 = arith.constant 5.000000e-01 : bf16
    %37 = vector.broadcast %cst_25 : bf16 to vector<16x256xbf16>
    %38 = arith.mulf %37, %36 : vector<16x256xbf16>
    %cst_26 = arith.constant 4.467770e-02 : bf16
    %39 = vector.broadcast %cst_26 : bf16 to vector<16x256xbf16>
    %40 = arith.mulf %39, %36 : vector<16x256xbf16>
    %41 = arith.mulf %40, %36 : vector<16x256xbf16>
    %42 = arith.mulf %41, %36 : vector<16x256xbf16>
    %43 = arith.addf %36, %42 : vector<16x256xbf16>
    %cst_27 = arith.constant 7.968750e-01 : bf16
    %44 = vector.broadcast %cst_27 : bf16 to vector<16x256xbf16>
    %45 = arith.mulf %44, %43 : vector<16x256xbf16>
    %46 = math.tanh %45 : vector<16x256xbf16>
    %cst_28 = arith.constant 1.000000e+00 : bf16
    %47 = vector.broadcast %cst_28 : bf16 to vector<16x256xbf16>
    %48 = arith.addf %47, %46 : vector<16x256xbf16>
    %49 = arith.mulf %38, %48 : vector<16x256xbf16>
    %c0_29 = arith.constant 0 : index
    %c0_30 = arith.constant 0 : index
    %50 = vector.load %arg3[%c0_29, %c0_30] : memref<256x512xbf16, #tpu.memory_space<vmem>>, vector<256x512xbf16>
    %cst_31 = arith.constant dense<0.000000e+00> : vector<16x512xf32>
    %51 = tpu.matmul %49, %50, %cst_31 {dimension_numbers = #tpu.dot_dimension_numbers<[1], [0], [0], [1], [0, 0, 1, 1], [], []>} : vector<16x256xbf16>, vector<256x512xbf16>, vector<16x512xf32> -> vector<16x512xf32>
    %52 = vector.broadcast %4 : vector<1x512xf32> to vector<16x512xf32>
    %53 = arith.addf %51, %52 : vector<16x512xf32>
    %cst_32 = arith.constant dense<0.000000e+00> : vector<16xf32>
    %54 = vector.multi_reduction <add>, %53, %cst_32 [1] : vector<16x512xf32> to vector<16xf32>
    %55 = vector.shape_cast %54 : vector<16xf32> to vector<16x1xf32>
    %cst_33 = arith.constant 5.120000e+02 : f32
    %56 = vector.broadcast %cst_33 : f32 to vector<16x1xf32>
    %57 = arith.divf %55, %56 : vector<16x1xf32>
    %58 = vector.broadcast %57 : vector<16x1xf32> to vector<16x512xf32>
    %59 = arith.subf %53, %58 : vector<16x512xf32>
    %60 = arith.mulf %59, %59 : vector<16x512xf32>
    %cst_34 = arith.constant dense<0.000000e+00> : vector<16xf32>
    %61 = vector.multi_reduction <add>, %60, %cst_34 [1] : vector<16x512xf32> to vector<16xf32>
    %62 = vector.shape_cast %61 : vector<16xf32> to vector<16x1xf32>
    %cst_35 = arith.constant 5.120000e+02 : f32
    %63 = vector.broadcast %cst_35 : f32 to vector<16x1xf32>
    %64 = arith.divf %62, %63 : vector<16x1xf32>
    %cst_36 = arith.constant 9.99999974E-6 : f32
    %65 = vector.broadcast %cst_36 : f32 to vector<16x1xf32>
    %66 = arith.addf %64, %65 : vector<16x1xf32>
    %67 = math.rsqrt %66 : vector<16x1xf32>
    %68 = vector.broadcast %67 : vector<16x1xf32> to vector<16x512xf32>
    %69 = arith.mulf %59, %68 : vector<16x512xf32>
    %70 = vector.broadcast %5 : vector<1x512xf32> to vector<16x512xf32>
    %71 = arith.mulf %69, %70 : vector<16x512xf32>
    %72 = vector.broadcast %6 : vector<1x512xf32> to vector<16x512xf32>
    %73 = arith.addf %71, %72 : vector<16x512xf32>
    %74 = arith.truncf %73 : vector<16x512xf32> to vector<16x512xbf16>
    %cst_37 = arith.constant 5.000000e-01 : bf16
    %75 = vector.broadcast %cst_37 : bf16 to vector<16x512xbf16>
    %76 = arith.mulf %75, %74 : vector<16x512xbf16>
    %cst_38 = arith.constant 4.467770e-02 : bf16
    %77 = vector.broadcast %cst_38 : bf16 to vector<16x512xbf16>
    %78 = arith.mulf %77, %74 : vector<16x512xbf16>
    %79 = arith.mulf %78, %74 : vector<16x512xbf16>
    %80 = arith.mulf %79, %74 : vector<16x512xbf16>
    %81 = arith.addf %74, %80 : vector<16x512xbf16>
    %cst_39 = arith.constant 7.968750e-01 : bf16
    %82 = vector.broadcast %cst_39 : bf16 to vector<16x512xbf16>
    %83 = arith.mulf %82, %81 : vector<16x512xbf16>
    %84 = math.tanh %83 : vector<16x512xbf16>
    %cst_40 = arith.constant 1.000000e+00 : bf16
    %85 = vector.broadcast %cst_40 : bf16 to vector<16x512xbf16>
    %86 = arith.addf %85, %84 : vector<16x512xbf16>
    %87 = arith.mulf %76, %86 : vector<16x512xbf16>
    %c0_41 = arith.constant 0 : index
    %c0_42 = arith.constant 0 : index
    %88 = vector.load %arg4[%c0_41, %c0_42] : memref<512x256xbf16, #tpu.memory_space<vmem>>, vector<512x256xbf16>
    %cst_43 = arith.constant dense<0.000000e+00> : vector<16x256xf32>
    %89 = tpu.matmul %87, %88, %cst_43 {dimension_numbers = #tpu.dot_dimension_numbers<[1], [0], [0], [1], [0, 0, 1, 1], [], []>} : vector<16x512xbf16>, vector<512x256xbf16>, vector<16x256xf32> -> vector<16x256xf32>
    %90 = vector.broadcast %3 : vector<1x256xf32> to vector<16x256xf32>
    %91 = arith.addf %89, %90 : vector<16x256xf32>
    %92 = arith.truncf %91 : vector<16x256xf32> to vector<16x256xbf16>
    %c0_44 = arith.constant 0 : index
    %c0_45 = arith.constant 0 : index
    %93 = vector.load %arg5[%c0_44, %c0_45] : memref<256x128xbf16, #tpu.memory_space<vmem>>, vector<256x128xbf16>
    %cst_46 = arith.constant dense<0.000000e+00> : vector<16x128xf32>
    %94 = tpu.matmul %92, %93, %cst_46 {dimension_numbers = #tpu.dot_dimension_numbers<[1], [0], [0], [1], [0, 0, 1, 1], [], []>} : vector<16x256xbf16>, vector<256x128xbf16>, vector<16x128xf32> -> vector<16x128xf32>
    %95 = vector.broadcast %7 : vector<1x128xf32> to vector<16x128xf32>
    %96 = arith.addf %94, %95 : vector<16x128xf32>
    %cst_47 = arith.constant 5.000000e-01 : f32
    %97 = vector.broadcast %cst_47 : f32 to vector<16x128xf32>
    %98 = arith.mulf %97, %96 : vector<16x128xf32>
    %cst_48 = arith.constant 4.471500e-02 : f32
    %99 = vector.broadcast %cst_48 : f32 to vector<16x128xf32>
    %100 = arith.mulf %99, %96 : vector<16x128xf32>
    %101 = arith.mulf %100, %96 : vector<16x128xf32>
    %102 = arith.mulf %101, %96 : vector<16x128xf32>
    %103 = arith.addf %96, %102 : vector<16x128xf32>
    %cst_49 = arith.constant 0.797884583 : f32
    %104 = vector.broadcast %cst_49 : f32 to vector<16x128xf32>
    %105 = arith.mulf %104, %103 : vector<16x128xf32>
    %106 = math.tanh %105 : vector<16x128xf32>
    %cst_50 = arith.constant 1.000000e+00 : f32
    %107 = vector.broadcast %cst_50 : f32 to vector<16x128xf32>
    %108 = arith.addf %107, %106 : vector<16x128xf32>
    %109 = arith.mulf %98, %108 : vector<16x128xf32>
    %110 = vector.shape_cast %8 : vector<1x128xf32> to vector<1x128xf32>
    %111 = vector.broadcast %110 : vector<1x128xf32> to vector<8x128xf32>
    %112 = arith.truncf %111 : vector<8x128xf32> to vector<8x128xbf16>
    %113 = arith.truncf %109 : vector<16x128xf32> to vector<16x128xbf16>
    %cst_51 = arith.constant dense<0.000000e+00> : vector<8x16xf32>
    %114 = tpu.matmul %112, %113, %cst_51 {dimension_numbers = #tpu.dot_dimension_numbers<[1], [1], [0], [0], [0, 0, 1, 0], [], []>} : vector<8x128xbf16>, vector<16x128xbf16>, vector<8x16xf32> -> vector<8x16xf32>
    %115 = vector.extract_strided_slice %114 {offsets = [0, 0], sizes = [1, 16], strides = [1, 1]} : vector<8x16xf32> to vector<1x16xf32>
    %116 = vector.broadcast %9 : vector<1x1xf32> to vector<1x16xf32>
    %117 = arith.addf %115, %116 : vector<1x16xf32>
    %118 = math.tanh %117 : vector<1x16xf32>
    %c0_52 = arith.constant 0 : index
    %c0_53 = arith.constant 0 : index
    %119 = vector.load %arg10[%c0_52, %c0_53] : memref<16x256xf32, #tpu.memory_space<vmem>>, vector<16x256xf32>
    tpu.vector_store %arg10[%c0_52, %c0_53], %91 {strides = array<i32>} : memref<16x256xf32, #tpu.memory_space<vmem>>, vector<16x256xf32>,
    %c0_54 = arith.constant 0 : index
    %c0_55 = arith.constant 0 : index
    %c0_56 = arith.constant 0 : index
    %120 = vector.load %arg9[%c0_54, %c0_55, %c0_56] : memref<1x1x16xf32, #tpu.memory_space<vmem>>, vector<1x1x16xf32>
    %121 = vector.shape_cast %120 : vector<1x1x16xf32> to vector<1x16xf32>
    %122 = vector.shape_cast %118 : vector<1x16xf32> to vector<1x1x16xf32>
    tpu.vector_store %arg9[%c0_54, %c0_55, %c0_56], %122 {strides = array<i32>} : memref<1x1x16xf32, #tpu.memory_space<vmem>>, vector<1x1x16xf32>,
    return
  }
  func.func @transform_0(%arg0: i32) -> (i32, i32) {
    %c0_i32 = arith.constant 0 : i32
    %c0_i32_0 = arith.constant 0 : i32
    return %arg0, %c0_i32 : i32, i32
  }
  func.func @transform_1(%arg0: i32) -> (i32, i32) {
    %c0_i32 = arith.constant 0 : i32
    %c0_i32_0 = arith.constant 0 : i32
    %c0_i32_1 = arith.constant 0 : i32
    return %c0_i32, %c0_i32_0 : i32, i32
  }
  func.func @transform_2(%arg0: i32) -> (i32, i32) {
    %c0_i32 = arith.constant 0 : i32
    %c0_i32_0 = arith.constant 0 : i32
    %c0_i32_1 = arith.constant 0 : i32
    return %c0_i32, %c0_i32_0 : i32, i32
  }
  func.func @transform_3(%arg0: i32) -> (i32, i32) {
    %c0_i32 = arith.constant 0 : i32
    %c0_i32_0 = arith.constant 0 : i32
    %c0_i32_1 = arith.constant 0 : i32
    return %c0_i32, %c0_i32_0 : i32, i32
  }
  func.func @transform_4(%arg0: i32) -> (i32, i32) {
    %c0_i32 = arith.constant 0 : i32
    %c0_i32_0 = arith.constant 0 : i32
    %c0_i32_1 = arith.constant 0 : i32
    return %c0_i32, %c0_i32_0 : i32, i32
  }
  func.func @transform_5(%arg0: i32) -> (i32, i32) {
    %c0_i32 = arith.constant 0 : i32
    %c0_i32_0 = arith.constant 0 : i32
    %c0_i32_1 = arith.constant 0 : i32
    return %c0_i32, %c0_i32_0 : i32, i32
  }
  func.func @transform_6(%arg0: i32) -> (i32, i32) {
    %c0_i32 = arith.constant 0 : i32
    %c0_i32_0 = arith.constant 0 : i32
    %c0_i32_1 = arith.constant 0 : i32
    return %c0_i32, %c0_i32_0 : i32, i32
  }
  func.func @transform_7(%arg0: i32) -> (i32, i32) {
    %c0_i32 = arith.constant 0 : i32
    %c0_i32_0 = arith.constant 0 : i32
    %c0_i32_1 = arith.constant 0 : i32
    return %c0_i32, %c0_i32_0 : i32, i32
  }
  func.func @transform_8(%arg0: i32) -> (i32, i32, i32) {
    %c0_i32 = arith.constant 0 : i32
    %c0_i32_0 = arith.constant 0 : i32
    %c0_i32_1 = arith.constant 0 : i32
    return %arg0, %c0_i32, %c0_i32_0 : i32, i32, i32
  }
  func.func @transform_9(%arg0: i32) -> (i32, i32) {
    %c0_i32 = arith.constant 0 : i32
    %c0_i32_0 = arith.constant 0 : i32
    return %arg0, %c0_i32 : i32, i32
  }
}

</mosaic_0001>

<llo_original>
// kernel: tpu_custom_call.1
$region0: #{tpu_custom_call.1}
  #allocation0 [shape = 'u32[]', space=smem, size = 0x4, offset = 0x4, fixed_abs, tag = 'smem constant byte address 0x4 - core index']
  #allocation1 [shape = 'u32[144,128]{1,0:T(1,128)}', space=vmem, size = 0x12000, scoped, tag = 'internal scratch']
  %s0 = inlined_call_operand.hbm [shape: f32[16,128], index: 0, kind: input, shape index: {}]
  %s1 = inlined_call_operand.hbm [shape: bf16[128,256], index: 1, kind: input, shape index: {}]
  %s2 = inlined_call_operand.hbm [shape: bf16[256,512], index: 2, kind: input, shape index: {}]
  %s3 = inlined_call_operand.hbm [shape: bf16[512,256], index: 3, kind: input, shape index: {}]
  %s4 = inlined_call_operand.hbm [shape: bf16[256,128], index: 4, kind: input, shape index: {}]
  %s5 = inlined_call_operand.hbm [shape: f32[4,256], index: 5, kind: input, shape index: {}]
  %s6 = inlined_call_operand.vmem [shape: f32[3,512], index: 6, kind: input, shape index: {}]
  %s7 = inlined_call_operand.vmem [shape: f32[3,128], index: 7, kind: input, shape index: {}]
  %s8 = inlined_call_operand.hbm [shape: f32[1,1,16], index: 8, kind: output, shape index: {0}]
  %s9 = inlined_call_operand.hbm [shape: f32[16,256], index: 9, kind: output, shape index: {1}]
  %10 = xla_tuple %s8, %s9
  %s11 = sld [smem:[#allocation0]]
  $region74: #{tpu_custom_call.1} parent=0
    _
  %s13 = ssub.s32 1, %s11
  %s14 = scalar_select 0, %s13, %s11
  $region1: #{tpu_custom_call.1} parent=0
    #allocation2 [shape = 'u8[8192]{0}', space=vmem, size = 0x2000, scoped, tag = 'input window, operand 0, single buffered']
    #allocation3 [shape = 's32[1]{0}', space=sflag, size = 0x4, scoped, tag = 'scoped memory for tpu_custom_call.1']
    #allocation4 [shape = 's32[1]{0}', space=sflag, size = 0x4, scoped, tag = 'scoped memory for tpu_custom_call.1']
    #allocation5 [shape = 'u8[65536]{0}', space=vmem, size = 0x10000, scoped, tag = 'input window, operand 1, single buffered']
    #allocation6 [shape = 's32[1]{0}', space=sflag, size = 0x4, scoped, tag = 'scoped memory for tpu_custom_call.1']
    #allocation7 [shape = 'u8[262144]{0}', space=vmem, size = 0x40000, scoped, tag = 'input window, operand 2, single buffered']
    #allocation8 [shape = 'u8[262144]{0}', space=vmem, size = 0x40000, scoped, tag = 'input window, operand 3, single buffered']
    #allocation9 [shape = 's32[1]{0}', space=sflag, size = 0x4, scoped, tag = 'scoped memory for tpu_custom_call.1']
    #allocation10 [shape = 'u8[65536]{0}', space=vmem, size = 0x10000, scoped, tag = 'input window, operand 4, single buffered']
    #allocation11 [shape = 'u8[4096]{0}', space=vmem, size = 0x1000, scoped, tag = 'input window, operand 5, single buffered']
    #allocation12 [shape = 's32[1]{0}', space=sflag, size = 0x4, scoped, tag = 'scoped memory for tpu_custom_call.1']
    #allocation13 [shape = 'u8[512]{0}', space=vmem, size = 0x400, scoped, tag = 'output window, operand 0, single buffered']
    #allocation14 [shape = 'u8[16384]{0}', space=vmem, size = 0x4000, scoped, tag = 'output window, operand 1, single buffered']
    #allocation15 [shape = 's32[1]{0}', space=sflag, size = 0x4, scoped, tag = 'scoped memory for tpu_custom_call.1']
    %15 = vsyncpa [#allocation3], 0
    %16 = vsyncpa [#allocation6], 0
    %17 = vsyncpa [#allocation9], 0
    %18 = vsyncpa [#allocation12], 0
    %19 = vsyncpa [#allocation4], 0
    %20 = vsyncpa [#allocation15], 0
    // Predicated region
    $region2: #{tpu_custom_call.1} parent=1 // pred_check
      _
    $region3: #{tpu_custom_call.1} parent=1 // pred_check_branch
      %22 = sbr.rel (0) target = $region5
    $region4: #{tpu_custom_call.1} parent=1 // pred_region
      %s24 = ssub.s32 256, 256
      %25 = vsyncadd [#allocation3], %s24
      %s26 = sshll.u32 [#allocation2], 4
      %s27 = int_to_ptr.vmem [resolvable:$true] %s26
      %32 = dma.hbm_to_vmem [thread:$0]  %s0, 256, %s27, [#allocation3], 128, 128, 8
    $region5: #{tpu_custom_call.1} parent=1 // pred_fallthru
      _
    // Predicated region
    $region6: #{tpu_custom_call.1} parent=1 // pred_check
      _
    $region7: #{tpu_custom_call.1} parent=1 // pred_check_branch
      %34 = sbr.rel (0) target = $region9
    $region8: #{tpu_custom_call.1} parent=1 // pred_region
      %s36 = ssub.s32 2048, 2048
      %37 = vsyncadd [#allocation6], %s36
      %s38 = sshll.u32 [#allocation5], 4
      %s39 = int_to_ptr.vmem [resolvable:$true] %s38
      %44 = dma.hbm_to_vmem [thread:$0]  %s1, 2048, %s39, [#allocation6], 128, 128, 8
    $region9: #{tpu_custom_call.1} parent=1 // pred_fallthru
      _
    // Predicated region
    $region10: #{tpu_custom_call.1} parent=1 // pred_check
      _
    $region11: #{tpu_custom_call.1} parent=1 // pred_check_branch
      %46 = sbr.rel (0) target = $region13
    $region12: #{tpu_custom_call.1} parent=1 // pred_region
      %s48 = ssub.s32 8192, 8192
      %49 = vsyncadd [#allocation6], %s48
      %s50 = sshll.u32 [#allocation7], 4
      %s51 = int_to_ptr.vmem [resolvable:$true] %s50
      %56 = dma.hbm_to_vmem [thread:$0]  %s2, 8192, %s51, [#allocation6], 256, 256, 16
    $region13: #{tpu_custom_call.1} parent=1 // pred_fallthru
      _
    // Predicated region
    $region14: #{tpu_custom_call.1} parent=1 // pred_check
      _
    $region15: #{tpu_custom_call.1} parent=1 // pred_check_branch
      %58 = sbr.rel (0) target = $region17
    $region16: #{tpu_custom_call.1} parent=1 // pred_region
      %s60 = ssub.s32 8192, 8192
      %61 = vsyncadd [#allocation9], %s60
      %s62 = sshll.u32 [#allocation8], 4
      %s63 = int_to_ptr.vmem [resolvable:$true] %s62
      %68 = dma.hbm_to_vmem [thread:$0]  %s3, 8192, %s63, [#allocation9], 128, 128, 8
    $region17: #{tpu_custom_call.1} parent=1 // pred_fallthru
      _
    // Predicated region
    $region18: #{tpu_custom_call.1} parent=1 // pred_check
      _
    $region19: #{tpu_custom_call.1} parent=1 // pred_check_branch
      %70 = sbr.rel (0) target = $region21
    $region20: #{tpu_custom_call.1} parent=1 // pred_region
      %s72 = ssub.s32 2048, 2048
      %73 = vsyncadd [#allocation9], %s72
      %s74 = sshll.u32 [#allocation10], 4
      %s75 = int_to_ptr.vmem [resolvable:$true] %s74
      %80 = dma.hbm_to_vmem [thread:$0]  %s4, 2048, %s75, [#allocation9], 64, 64, 4
    $region21: #{tpu_custom_call.1} parent=1 // pred_fallthru
      _
    // Predicated region
    $region22: #{tpu_custom_call.1} parent=1 // pred_check
      _
    $region23: #{tpu_custom_call.1} parent=1 // pred_check_branch
      %82 = sbr.rel (0) target = $region25
    $region24: #{tpu_custom_call.1} parent=1 // pred_region
      %s84 = ssub.s32 128, 128
      %85 = vsyncadd [#allocation12], %s84
      %s87 = sshll.u32 [#allocation11], 4
      %s88 = int_to_ptr.vmem [resolvable:$true] %s87
      %90 = dma.hbm_to_vmem [thread:$0]  %s5, 128, %s88, [#allocation12]
    $region25: #{tpu_custom_call.1} parent=1 // pred_fallthru
      _
    // Predicated region
    $region26: #{tpu_custom_call.1} parent=1 // pred_check
      _
    $region27: #{tpu_custom_call.1} parent=1 // pred_check_branch
      %92 = sbr.rel (0) target = $region29
    $region28: #{tpu_custom_call.1} parent=1 // pred_region
      _
    $region29: #{tpu_custom_call.1} parent=1 // pred_fallthru
      _
    // Predicated region
    $region30: #{tpu_custom_call.1} parent=1 // pred_check
      _
    $region31: #{tpu_custom_call.1} parent=1 // pred_check_branch
      %94 = sbr.rel (0) target = $region33
    $region32: #{tpu_custom_call.1} parent=1 // pred_region
      _
    $region33: #{tpu_custom_call.1} parent=1 // pred_fallthru
      _
    // Predicated region
    $region34: #{tpu_custom_call.1} parent=1 // pred_check
      _
    $region35: #{tpu_custom_call.1} parent=1 // pred_check_branch
      %96 = sbr.rel (0) target = $region37
    $region36: #{tpu_custom_call.1} parent=1 // pred_region
      %97 = dma.done [#allocation3], 256
    $region37: #{tpu_custom_call.1} parent=1 // pred_fallthru
      _
    // Predicated region
    $region38: #{tpu_custom_call.1} parent=1 // pred_check
      _
    $region39: #{tpu_custom_call.1} parent=1 // pred_check_branch
      %99 = sbr.rel (0) target = $region41
    $region40: #{tpu_custom_call.1} parent=1 // pred_region
      %100 = dma.done [#allocation6], 2048
    $region41: #{tpu_custom_call.1} parent=1 // pred_fallthru
      _
    // Predicated region
    $region42: #{tpu_custom_call.1} parent=1 // pred_check
      _
    $region43: #{tpu_custom_call.1} parent=1 // pred_check_branch
      %102 = sbr.rel (0) target = $region45
    $region44: #{tpu_custom_call.1} parent=1 // pred_region
      %103 = dma.done [#allocation6], 8192
    $region45: #{tpu_custom_call.1} parent=1 // pred_fallthru
      _
    // Predicated region
    $region46: #{tpu_custom_call.1} parent=1 // pred_check
      _
    $region47: #{tpu_custom_call.1} parent=1 // pred_check_branch
      %105 = sbr.rel (0) target = $region49
    $region48: #{tpu_custom_call.1} parent=1 // pred_region
      %106 = dma.done [#allocation9], 8192
    $region49: #{tpu_custom_call.1} parent=1 // pred_fallthru
      _
    // Predicated region
    $region50: #{tpu_custom_call.1} parent=1 // pred_check
      _
    $region51: #{tpu_custom_call.1} parent=1 // pred_check_branch
      %108 = sbr.rel (0) target = $region53
    $region52: #{tpu_custom_call.1} parent=1 // pred_region
      %109 = dma.done [#allocation9], 2048
    $region53: #{tpu_custom_call.1} parent=1 // pred_fallthru
      _
    // Predicated region
    $region54: #{tpu_custom_call.1} parent=1 // pred_check
      _
    $region55: #{tpu_custom_call.1} parent=1 // pred_check_branch
      %111 = sbr.rel (0) target = $region57
    $region56: #{tpu_custom_call.1} parent=1 // pred_region
      %112 = dma.done [#allocation12], 128
    $region57: #{tpu_custom_call.1} parent=1 // pred_fallthru
      _
    %v118 = vld [vmem:[#allocation11] ss:$4 sm:$0x3]
    %s119 = scalar_lea.vmem [#allocation11], 1
    %v120 = vld [vmem:[%s119] ss:$4 sm:$0x3]
    %s121 = scalar_lea.vmem [#allocation11], 2
    %v122 = vld [vmem:[%s121] ss:$4 sm:$0x3]
    %s123 = scalar_lea.vmem [#allocation11], 3
    %v124 = vld [vmem:[%s123] ss:$4 sm:$0x3]
    %v125 = vld [vmem:[%s6] ss:$4 sm:$0xf]
    %s126 = scalar_lea.vmem %s6, 1
    %v127 = vld [vmem:[%s126] ss:$4 sm:$0xf]
    %s128 = scalar_lea.vmem %s6, 2
    %v129 = vld [vmem:[%s128] ss:$4 sm:$0xf]
    %v130 = vld [vmem:[%s7] sm:$0x1]
    %v131 = vld [vmem:[%s7 + $0x1] sm:$0x1]
    %v132 = vld [vmem:[%s7 + $0x2] sm:$0x1]
    %v133 = vld [vmem:[#allocation2] sm:$0xff]
    %v134 = vld [vmem:[#allocation2 + $0x8] sm:$0xff]
    %v135 = vpack.c.bf16 %v134, %v133
    %v136 = vld [vmem:[#allocation5] sm:$0xff]
    %v137 = vld [vmem:[#allocation5 + $0x8] sm:$0xff]
    %v138 = vld [vmem:[#allocation5 + $0x10] sm:$0xff]
    %v139 = vld [vmem:[#allocation5 + $0x18] sm:$0xff]
    %v140 = vld [vmem:[#allocation5 + $0x20] sm:$0xff]
    %v141 = vld [vmem:[#allocation5 + $0x28] sm:$0xff]
    %v142 = vld [vmem:[#allocation5 + $0x30] sm:$0xff]
    %v143 = vld [vmem:[#allocation5 + $0x38] sm:$0xff]
    %v144 = vld [vmem:[#allocation5 + $0x40] sm:$0xff]
    %v145 = vld [vmem:[#allocation5 + $0x48] sm:$0xff]
    %v146 = vld [vmem:[#allocation5 + $0x50] sm:$0xff]
    %v147 = vld [vmem:[#allocation5 + $0x58] sm:$0xff]
    %v148 = vld [vmem:[#allocation5 + $0x60] sm:$0xff]
    %v149 = vld [vmem:[#allocation5 + $0x68] sm:$0xff]
    %v150 = vld [vmem:[#allocation5 + $0x70] sm:$0xff]
    %v151 = vld [vmem:[#allocation5 + $0x78] sm:$0xff]
    %v153 = vlaneseq
    %v154 = vshrl.u32 %v153, 7
    %v155 = vsub.s32 0, %v154
    %v156 = vrot.slane %v118, %v155
    %v157 = vlaneseq
    %v158 = vshrl.u32 %v157, 7
    %v159 = vsub.s32 1, %v158
    %v160 = vrot.slane %v118, %v159
    %v179 = vunpack.c.l.b16 %v136
    %v180 = vunpack.c.h.b16 %v136
    %v181 = vunpack.c.l.b16 %v137
    %v182 = vunpack.c.h.b16 %v137
    %v183 = vunpack.c.l.b16 %v138
    %v184 = vunpack.c.h.b16 %v138
    %v185 = vunpack.c.l.b16 %v139
    %v186 = vunpack.c.h.b16 %v139
    %v187 = vunpack.c.l.b16 %v140
    %v188 = vunpack.c.h.b16 %v140
    %v189 = vunpack.c.l.b16 %v141
    %v190 = vunpack.c.h.b16 %v141
    %v191 = vunpack.c.l.b16 %v142
    %v192 = vunpack.c.h.b16 %v142
    %v193 = vunpack.c.l.b16 %v143
    %v194 = vunpack.c.h.b16 %v143
    %v195 = vunpack.c.l.b16 %v144
    %v196 = vunpack.c.h.b16 %v144
    %v197 = vunpack.c.l.b16 %v145
    %v198 = vunpack.c.h.b16 %v145
    %v199 = vunpack.c.l.b16 %v146
    %v200 = vunpack.c.h.b16 %v146
    %v201 = vunpack.c.l.b16 %v147
    %v202 = vunpack.c.h.b16 %v147
    %v203 = vunpack.c.l.b16 %v148
    %v204 = vunpack.c.h.b16 %v148
    %v205 = vunpack.c.l.b16 %v149
    %v206 = vunpack.c.h.b16 %v149
    %v207 = vunpack.c.l.b16 %v150
    %v208 = vunpack.c.h.b16 %v150
    %v209 = vunpack.c.l.b16 %v151
    %v210 = vunpack.c.h.b16 %v151
    %v211 = vpack.c.b16 %v181, %v179
    %v212 = vpack.c.b16 %v182, %v180
    %v213 = vpack.c.b16 %v185, %v183
    %v214 = vpack.c.b16 %v186, %v184
    %v215 = vpack.c.b16 %v189, %v187
    %v216 = vpack.c.b16 %v190, %v188
    %v217 = vpack.c.b16 %v193, %v191
    %v218 = vpack.c.b16 %v194, %v192
    %v219 = vpack.c.b16 %v197, %v195
    %v220 = vpack.c.b16 %v198, %v196
    %v221 = vpack.c.b16 %v201, %v199
    %v222 = vpack.c.b16 %v202, %v200
    %v223 = vpack.c.b16 %v205, %v203
    %v224 = vpack.c.b16 %v206, %v204
    %v225 = vpack.c.b16 %v209, %v207
    %v226 = vpack.c.b16 %v210, %v208
    %243 = vmatprep.subr.bf16.mxu0 %v212
    %244 = vmatpush1.bf16.msra.mxu0 %v211
    %245 = vmatprep.subr.bf16.mxu0 %v214
    %246 = vmatpush1.bf16.msra.mxu0 %v213
    %247 = vmatprep.subr.bf16.mxu0 %v216
    %248 = vmatpush1.bf16.msra.mxu0 %v215
    %249 = vmatprep.subr.bf16.mxu0 %v218
    %250 = vmatpush1.bf16.msra.mxu0 %v217
    %251 = vmatprep.subr.bf16.mxu0 %v220
    %252 = vmatpush1.bf16.msra.mxu0 %v219
    %253 = vmatprep.subr.bf16.mxu0 %v222
    %254 = vmatpush1.bf16.msra.mxu0 %v221
    %255 = vmatprep.subr.bf16.mxu0 %v224
    %256 = vmatpush1.bf16.msra.mxu0 %v223
    %257 = vmatprep.subr.bf16.mxu0 %v226
    %258 = vmatpush1.bf16.msra.mxu0 %v225
    %259 = vmatprep.subr.bf16.mxu0 0
    %260 = vmatpush1.bf16.msra.mxu0 0
    %261 = vmatprep.subr.bf16.mxu0 0
    %262 = vmatpush1.bf16.msra.mxu0 0
    %263 = vmatprep.subr.bf16.mxu0 0
    %264 = vmatpush1.bf16.msra.mxu0 0
    %265 = vmatprep.subr.bf16.mxu0 0
    %266 = vmatpush1.bf16.msra.mxu0 0
    %267 = vmatprep.subr.bf16.mxu0 0
    %268 = vmatpush1.bf16.msra.mxu0 0
    %269 = vmatprep.subr.bf16.mxu0 0
    %270 = vmatpush1.bf16.msra.mxu0 0
    %271 = vmatprep.subr.bf16.mxu0 0
    %272 = vmatpush1.bf16.msra.mxu0 0
    %273 = vmatprep.subr.bf16.mxu0 0
    %274 = vmatpush1.bf16.msra.mxu0 0
    %275 = vmatprep.mubr.bf16.mxu0 0
    %276 = vmatmul.mubr.bf16.gmra.mrb[0].mxu0 %v135
    %v277 = vpop.f32.mrb[0].mxu0
    %v278 = vadd.f32 %v156, %v277
    %v279 = vpop.f32.mrb[0].mxu0
    %v280 = vadd.f32 %v160, %v279
    %v281 = vpop.f32.mrb[0].mxu0
    %v282 = vadd.f32 %v156, %v281
    %v283 = vpop.f32.mrb[0].mxu0
    %v284 = vadd.f32 %v160, %v283
    %285 = vdwg.mxu0
    %v286 = vadd.f32 %v278, %v280
    %287 = vadd.xlane.f32.xlu0 %v286
    %v288 = vpop.xlane.xlu0 %287
    %v289 = vadd.f32 %v282, %v284
    %290 = vadd.xlane.f32.xlu0 %v289
    %v291 = vpop.xlane.xlu0 %290
    %v292 = vrcp.pop 256.0
    %v293 = vmul.f32 %v288, %v292
    %v294 = vmul.f32 %v291, %v292
    %v295 = vsub.f32 %v278, %v293
    %v296 = vsub.f32 %v280, %v293
    %v297 = vsub.f32 %v282, %v294
    %v298 = vsub.f32 %v284, %v294
    %v299 = vmul.f32 %v295, %v295
    %v300 = vmul.f32 %v296, %v296
    %v301 = vmul.f32 %v297, %v297
    %v302 = vmul.f32 %v298, %v298
    %v303 = vadd.f32 %v299, %v300
    %304 = vadd.xlane.f32.xlu0 %v303
    %v305 = vpop.xlane.xlu0 %304
    %v306 = vadd.f32 %v301, %v302
    %307 = vadd.xlane.f32.xlu0 %v306
    %v308 = vpop.xlane.xlu0 %307
    %v309 = vmul.f32 %v305, %v292
    %v310 = vmul.f32 %v308, %v292
    %v311 = vadd.f32 %v309, 1e-05
    %v312 = vadd.f32 %v310, 1e-05
    %v313 = vrsqrt.pop %v311
    %v314 = vrsqrt.pop %v312
    %v315 = vmul.f32 %v295, %v313
    %v316 = vmul.f32 %v296, %v313
    %v317 = vmul.f32 %v297, %v314
    %v318 = vmul.f32 %v298, %v314
    %v320 = vlaneseq
    %v321 = vshrl.u32 %v320, 7
    %v322 = vsub.s32 0, %v321
    %v323 = vrot.slane %v120, %v322
    %v324 = vlaneseq
    %v325 = vshrl.u32 %v324, 7
    %v326 = vsub.s32 1, %v325
    %v327 = vrot.slane %v120, %v326
    %v330 = vmul.f32 %v315, %v323
    %v331 = vmul.f32 %v316, %v327
    %v332 = vmul.f32 %v317, %v323
    %v333 = vmul.f32 %v318, %v327
    %v335 = vlaneseq
    %v336 = vshrl.u32 %v335, 7
    %v337 = vsub.s32 0, %v336
    %v338 = vrot.slane %v122, %v337
    %v339 = vlaneseq
    %v340 = vshrl.u32 %v339, 7
    %v341 = vsub.s32 1, %v340
    %v342 = vrot.slane %v122, %v341
    %v345 = vadd.f32 %v330, %v338
    %v346 = vadd.f32 %v331, %v342
    %v347 = vadd.f32 %v332, %v338
    %v348 = vadd.f32 %v333, %v342
    %v349 = vpack.c.bf16 %v347, %v345
    %v350 = vpack.c.bf16 %v348, %v346
    %v351 = vmul.bf16 %v349, 1056980736
    %v352 = vmul.bf16 %v350, 1056980736
    %v353 = vmul.bf16 %v349, 1027030327
    %v354 = vmul.bf16 %v350, 1027030327
    %v355 = vmul.bf16 %v353, %v349
    %v356 = vmul.bf16 %v354, %v350
    %v357 = vmul.bf16 %v355, %v349
    %v358 = vmul.bf16 %v356, %v350
    %v359 = vadd.bf16 %v349, %v357
    %v360 = vadd.bf16 %v350, %v358
    %v361 = vmul.bf16 %v359, 1061961548
    %v362 = vmul.bf16 %v360, 1061961548
    %v363 = vtanh.bf16.pop %v361
    %v364 = vtanh.bf16.pop %v362
    %v365 = vadd.bf16 %v363, 1065369472
    %v366 = vadd.bf16 %v364, 1065369472
    %v367 = vmul.bf16 %v351, %v365
    %v368 = vmul.bf16 %v352, %v366
    %v369 = vld [vmem:[#allocation7] sm:$0xff]
    %v370 = vld [vmem:[#allocation7 + $0x8] sm:$0xff]
    %v371 = vld [vmem:[#allocation7 + $0x10] sm:$0xff]
    %v372 = vld [vmem:[#allocation7 + $0x18] sm:$0xff]
    %v373 = vld [vmem:[#allocation7 + $0x20] sm:$0xff]
    %v374 = vld [vmem:[#allocation7 + $0x28] sm:$0xff]
    %v375 = vld [vmem:[#allocation7 + $0x30] sm:$0xff]
    %v376 = vld [vmem:[#allocation7 + $0x38] sm:$0xff]
    %v377 = vld [vmem:[#allocation7 + $0x40] sm:$0xff]
    %v378 = vld [vmem:[#allocation7 + $0x48] sm:$0xff]
    %v379 = vld [vmem:[#allocation7 + $0x50] sm:$0xff]
    %v380 = vld [vmem:[#allocation7 + $0x58] sm:$0xff]
    %v381 = vld [vmem:[#allocation7 + $0x60] sm:$0xff]
    %v382 = vld [vmem:[#allocation7 + $0x68] sm:$0xff]
    %v383 = vld [vmem:[#allocation7 + $0x70] sm:$0xff]
    %v384 = vld [vmem:[#allocation7 + $0x78] sm:$0xff]
    %v385 = vld [vmem:[#allocation7 + $0x80] sm:$0xff]
    %v386 = vld [vmem:[#allocation7 + $0x88] sm:$0xff]
    %v387 = vld [vmem:[#allocation7 + $0x90] sm:$0xff]
    %v388 = vld [vmem:[#allocation7 + $0x98] sm:$0xff]
    %v389 = vld [vmem:[#allocation7 + $0xa0] sm:$0xff]
    %v390 = vld [vmem:[#allocation7 + $0xa8] sm:$0xff]
    %v391 = vld [vmem:[#allocation7 + $0xb0] sm:$0xff]
    %v392 = vld [vmem:[#allocation7 + $0xb8] sm:$0xff]
    %v393 = vld [vmem:[#allocation7 + $0xc0] sm:$0xff]
    %v394 = vld [vmem:[#allocation7 + $0xc8] sm:$0xff]
    %v395 = vld [vmem:[#allocation7 + $0xd0] sm:$0xff]
    %v396 = vld [vmem:[#allocation7 + $0xd8] sm:$0xff]
    %v397 = vld [vmem:[#allocation7 + $0xe0] sm:$0xff]
    %v398 = vld [vmem:[#allocation7 + $0xe8] sm:$0xff]
    %v399 = vld [vmem:[#allocation7 + $0xf0] sm:$0xff]
    %v400 = vld [vmem:[#allocation7 + $0xf8] sm:$0xff]
    %v401 = vld [vmem:[#allocation7 + $0x100] sm:$0xff]
    %v402 = vld [vmem:[#allocation7 + $0x108] sm:$0xff]
    %v403 = vld [vmem:[#allocation7 + $0x110] sm:$0xff]
    %v404 = vld [vmem:[#allocation7 + $0x118] sm:$0xff]
    %v405 = vld [vmem:[#allocation7 + $0x120] sm:$0xff]
    %v406 = vld [vmem:[#allocation7 + $0x128] sm:$0xff]
    %v407 = vld [vmem:[#allocation7 + $0x130] sm:$0xff]
    %v408 = vld [vmem:[#allocation7 + $0x138] sm:$0xff]
    %v409 = vld [vmem:[#allocation7 + $0x140] sm:$0xff]
    %v410 = vld [vmem:[#allocation7 + $0x148] sm:$0xff]
    %v411 = vld [vmem:[#allocation7 + $0x150] sm:$0xff]
    %v412 = vld [vmem:[#allocation7 + $0x158] sm:$0xff]
    %v413 = vld [vmem:[#allocation7 + $0x160] sm:$0xff]
    %v414 = vld [vmem:[#allocation7 + $0x168] sm:$0xff]
    %v415 = vld [vmem:[#allocation7 + $0x170] sm:$0xff]
    %v416 = vld [vmem:[#allocation7 + $0x178] sm:$0xff]
    %v417 = vld [vmem:[#allocation7 + $0x180] sm:$0xff]
    %v418 = vld [vmem:[#allocation7 + $0x188] sm:$0xff]
    %v419 = vld [vmem:[#allocation7 + $0x190] sm:$0xff]
    %v420 = vld [vmem:[#allocation7 + $0x198] sm:$0xff]
    %v421 = vld [vmem:[#allocation7 + $0x1a0] sm:$0xff]
    %v422 = vld [vmem:[#allocation7 + $0x1a8] sm:$0xff]
    %v423 = vld [vmem:[#allocation7 + $0x1b0] sm:$0xff]
    %v424 = vld [vmem:[#allocation7 + $0x1b8] sm:$0xff]
    %v425 = vld [vmem:[#allocation7 + $0x1c0] sm:$0xff]
    %v426 = vld [vmem:[#allocation7 + $0x1c8] sm:$0xff]
    %v427 = vld [vmem:[#allocation7 + $0x1d0] sm:$0xff]
    %v428 = vld [vmem:[#allocation7 + $0x1d8] sm:$0xff]
    %v429 = vld [vmem:[#allocation7 + $0x1e0] sm:$0xff]
    %v430 = vld [vmem:[#allocation7 + $0x1e8] sm:$0xff]
    %v431 = vld [vmem:[#allocation7 + $0x1f0] sm:$0xff]
    %v432 = vld [vmem:[#allocation7 + $0x1f8] sm:$0xff]
    %v434 = vlaneseq
    %v435 = vshrl.u32 %v434, 7
    %v436 = vsub.s32 0, %v435
    %v437 = vrot.slane %v125, %v436
    %v438 = vlaneseq
    %v439 = vshrl.u32 %v438, 7
    %v440 = vsub.s32 1, %v439
    %v441 = vrot.slane %v125, %v440
    %v442 = vlaneseq
    %v443 = vshrl.u32 %v442, 7
    %v444 = vsub.s32 2, %v443
    %v445 = vrot.slane %v125, %v444
    %v446 = vlaneseq
    %v447 = vshrl.u32 %v446, 7
    %v448 = vsub.s32 3, %v447
    %v449 = vrot.slane %v125, %v448
    %v518 = vunpack.c.l.b16 %v369
    %v519 = vunpack.c.h.b16 %v369
    %v520 = vunpack.c.l.b16 %v370
    %v521 = vunpack.c.h.b16 %v370
    %v522 = vunpack.c.l.b16 %v371
    %v523 = vunpack.c.h.b16 %v371
    %v524 = vunpack.c.l.b16 %v372
    %v525 = vunpack.c.h.b16 %v372
    %v526 = vunpack.c.l.b16 %v373
    %v527 = vunpack.c.h.b16 %v373
    %v528 = vunpack.c.l.b16 %v374
    %v529 = vunpack.c.h.b16 %v374
    %v530 = vunpack.c.l.b16 %v375
    %v531 = vunpack.c.h.b16 %v375
    %v532 = vunpack.c.l.b16 %v376
    %v533 = vunpack.c.h.b16 %v376
    %v534 = vunpack.c.l.b16 %v377
    %v535 = vunpack.c.h.b16 %v377
    %v536 = vunpack.c.l.b16 %v378
    %v537 = vunpack.c.h.b16 %v378
    %v538 = vunpack.c.l.b16 %v379
    %v539 = vunpack.c.h.b16 %v379
    %v540 = vunpack.c.l.b16 %v380
    %v541 = vunpack.c.h.b16 %v380
    %v542 = vunpack.c.l.b16 %v381
    %v543 = vunpack.c.h.b16 %v381
    %v544 = vunpack.c.l.b16 %v382
    %v545 = vunpack.c.h.b16 %v382
    %v546 = vunpack.c.l.b16 %v383
    %v547 = vunpack.c.h.b16 %v383
    %v548 = vunpack.c.l.b16 %v384
    %v549 = vunpack.c.h.b16 %v384
    %v550 = vunpack.c.l.b16 %v385
    %v551 = vunpack.c.h.b16 %v385
    %v552 = vunpack.c.l.b16 %v386
    %v553 = vunpack.c.h.b16 %v386
    %v554 = vunpack.c.l.b16 %v387
    %v555 = vunpack.c.h.b16 %v387
    %v556 = vunpack.c.l.b16 %v388
    %v557 = vunpack.c.h.b16 %v388
    %v558 = vunpack.c.l.b16 %v389
    %v559 = vunpack.c.h.b16 %v389
    %v560 = vunpack.c.l.b16 %v390
    %v561 = vunpack.c.h.b16 %v390
    %v562 = vunpack.c.l.b16 %v391
    %v563 = vunpack.c.h.b16 %v391
    %v564 = vunpack.c.l.b16 %v392
    %v565 = vunpack.c.h.b16 %v392
    %v566 = vunpack.c.l.b16 %v393
    %v567 = vunpack.c.h.b16 %v393
    %v568 = vunpack.c.l.b16 %v394
    %v569 = vunpack.c.h.b16 %v394
    %v570 = vunpack.c.l.b16 %v395
    %v571 = vunpack.c.h.b16 %v395
    %v572 = vunpack.c.l.b16 %v396
    %v573 = vunpack.c.h.b16 %v396
    %v574 = vunpack.c.l.b16 %v397
    %v575 = vunpack.c.h.b16 %v397
    %v576 = vunpack.c.l.b16 %v398
    %v577 = vunpack.c.h.b16 %v398
    %v578 = vunpack.c.l.b16 %v399
    %v579 = vunpack.c.h.b16 %v399
    %v580 = vunpack.c.l.b16 %v400
    %v581 = vunpack.c.h.b16 %v400
    %v582 = vunpack.c.l.b16 %v401
    %v583 = vunpack.c.h.b16 %v401
    %v584 = vunpack.c.l.b16 %v402
    %v585 = vunpack.c.h.b16 %v402
    %v586 = vunpack.c.l.b16 %v403
    %v587 = vunpack.c.h.b16 %v403
    %v588 = vunpack.c.l.b16 %v404
    %v589 = vunpack.c.h.b16 %v404
    %v590 = vunpack.c.l.b16 %v405
    %v591 = vunpack.c.h.b16 %v405
    %v592 = vunpack.c.l.b16 %v406
    %v593 = vunpack.c.h.b16 %v406
    %v594 = vunpack.c.l.b16 %v407
    %v595 = vunpack.c.h.b16 %v407
    %v596 = vunpack.c.l.b16 %v408
    %v597 = vunpack.c.h.b16 %v408
    %v598 = vunpack.c.l.b16 %v409
    %v599 = vunpack.c.h.b16 %v409
    %v600 = vunpack.c.l.b16 %v410
    %v601 = vunpack.c.h.b16 %v410
    %v602 = vunpack.c.l.b16 %v411
    %v603 = vunpack.c.h.b16 %v411
    %v604 = vunpack.c.l.b16 %v412
    %v605 = vunpack.c.h.b16 %v412
    %v606 = vunpack.c.l.b16 %v413
    %v607 = vunpack.c.h.b16 %v413
    %v608 = vunpack.c.l.b16 %v414
    %v609 = vunpack.c.h.b16 %v414
    %v610 = vunpack.c.l.b16 %v415
    %v611 = vunpack.c.h.b16 %v415
    %v612 = vunpack.c.l.b16 %v416
    %v613 = vunpack.c.h.b16 %v416
    %v614 = vunpack.c.l.b16 %v417
    %v615 = vunpack.c.h.b16 %v417
    %v616 = vunpack.c.l.b16 %v418
    %v617 = vunpack.c.h.b16 %v418
    %v618 = vunpack.c.l.b16 %v419
    %v619 = vunpack.c.h.b16 %v419
    %v620 = vunpack.c.l.b16 %v420
    %v621 = vunpack.c.h.b16 %v420
    %v622 = vunpack.c.l.b16 %v421
    %v623 = vunpack.c.h.b16 %v421
    %v624 = vunpack.c.l.b16 %v422
    %v625 = vunpack.c.h.b16 %v422
    %v626 = vunpack.c.l.b16 %v423
    %v627 = vunpack.c.h.b16 %v423
    %v628 = vunpack.c.l.b16 %v424
    %v629 = vunpack.c.h.b16 %v424
    %v630 = vunpack.c.l.b16 %v425
    %v631 = vunpack.c.h.b16 %v425
    %v632 = vunpack.c.l.b16 %v426
    %v633 = vunpack.c.h.b16 %v426
    %v634 = vunpack.c.l.b16 %v427
    %v635 = vunpack.c.h.b16 %v427
    %v636 = vunpack.c.l.b16 %v428
    %v637 = vunpack.c.h.b16 %v428
    %v638 = vunpack.c.l.b16 %v429
    %v639 = vunpack.c.h.b16 %v429
    %v640 = vunpack.c.l.b16 %v430
    %v641 = vunpack.c.h.b16 %v430
    %v642 = vunpack.c.l.b16 %v431
    %v643 = vunpack.c.h.b16 %v431
    %v644 = vunpack.c.l.b16 %v432
    %v645 = vunpack.c.h.b16 %v432
    %v646 = vpack.c.b16 %v522, %v518
    %v647 = vpack.c.b16 %v523, %v519
    %v648 = vpack.c.b16 %v524, %v520
    %v649 = vpack.c.b16 %v525, %v521
    %v650 = vpack.c.b16 %v530, %v526
    %v651 = vpack.c.b16 %v531, %v527
    %v652 = vpack.c.b16 %v532, %v528
    %v653 = vpack.c.b16 %v533, %v529
    %v654 = vpack.c.b16 %v538, %v534
    %v655 = vpack.c.b16 %v539, %v535
    %v656 = vpack.c.b16 %v540, %v536
    %v657 = vpack.c.b16 %v541, %v537
    %v658 = vpack.c.b16 %v546, %v542
    %v659 = vpack.c.b16 %v547, %v543
    %v660 = vpack.c.b16 %v548, %v544
    %v661 = vpack.c.b16 %v549, %v545
    %v662 = vpack.c.b16 %v554, %v550
    %v663 = vpack.c.b16 %v555, %v551
    %v664 = vpack.c.b16 %v556, %v552
    %v665 = vpack.c.b16 %v557, %v553
    %v666 = vpack.c.b16 %v562, %v558
    %v667 = vpack.c.b16 %v563, %v559
    %v668 = vpack.c.b16 %v564, %v560
    %v669 = vpack.c.b16 %v565, %v561
    %v670 = vpack.c.b16 %v570, %v566
    %v671 = vpack.c.b16 %v571, %v567
    %v672 = vpack.c.b16 %v572, %v568
    %v673 = vpack.c.b16 %v573, %v569
    %v674 = vpack.c.b16 %v578, %v574
    %v675 = vpack.c.b16 %v579, %v575
    %v676 = vpack.c.b16 %v580, %v576
    %v677 = vpack.c.b16 %v581, %v577
    %v678 = vpack.c.b16 %v586, %v582
    %v679 = vpack.c.b16 %v587, %v583
    %v680 = vpack.c.b16 %v588, %v584
    %v681 = vpack.c.b16 %v589, %v585
    %v682 = vpack.c.b16 %v594, %v590
    %v683 = vpack.c.b16 %v595, %v591
    %v684 = vpack.c.b16 %v596, %v592
    %v685 = vpack.c.b16 %v597, %v593
    %v686 = vpack.c.b16 %v602, %v598
    %v687 = vpack.c.b16 %v603, %v599
    %v688 = vpack.c.b16 %v604, %v600
    %v689 = vpack.c.b16 %v605, %v601
    %v690 = vpack.c.b16 %v610, %v606
    %v691 = vpack.c.b16 %v611, %v607
    %v692 = vpack.c.b16 %v612, %v608
    %v693 = vpack.c.b16 %v613, %v609
    %v694 = vpack.c.b16 %v618, %v614
    %v695 = vpack.c.b16 %v619, %v615
    %v696 = vpack.c.b16 %v620, %v616
    %v697 = vpack.c.b16 %v621, %v617
    %v698 = vpack.c.b16 %v626, %v622
    %v699 = vpack.c.b16 %v627, %v623
    %v700 = vpack.c.b16 %v628, %v624
    %v701 = vpack.c.b16 %v629, %v625
    %v702 = vpack.c.b16 %v634, %v630
    %v703 = vpack.c.b16 %v635, %v631
    %v704 = vpack.c.b16 %v636, %v632
    %v705 = vpack.c.b16 %v637, %v633
    %v706 = vpack.c.b16 %v642, %v638
    %v707 = vpack.c.b16 %v643, %v639
    %v708 = vpack.c.b16 %v644, %v640
    %v709 = vpack.c.b16 %v645, %v641
    %774 = vmatprep.subr.bf16.mxu0 %v647
    %775 = vmatpush1.bf16.msra.mxu0 %v646
    %776 = vmatprep.subr.bf16.mxu0 %v651
    %777 = vmatpush1.bf16.msra.mxu0 %v650
    %778 = vmatprep.subr.bf16.mxu0 %v655
    %779 = vmatpush1.bf16.msra.mxu0 %v654
    %780 = vmatprep.subr.bf16.mxu0 %v659
    %781 = vmatpush1.bf16.msra.mxu0 %v658
    %782 = vmatprep.subr.bf16.mxu0 %v663
    %783 = vmatpush1.bf16.msra.mxu0 %v662
    %784 = vmatprep.subr.bf16.mxu0 %v667
    %785 = vmatpush1.bf16.msra.mxu0 %v666
    %786 = vmatprep.subr.bf16.mxu0 %v671
    %787 = vmatpush1.bf16.msra.mxu0 %v670
    %788 = vmatprep.subr.bf16.mxu0 %v675
    %789 = vmatpush1.bf16.msra.mxu0 %v674
    %790 = vmatprep.subr.bf16.mxu0 %v679
    %791 = vmatpush1.bf16.msra.mxu0 %v678
    %792 = vmatprep.subr.bf16.mxu0 %v683
    %793 = vmatpush1.bf16.msra.mxu0 %v682
    %794 = vmatprep.subr.bf16.mxu0 %v687
    %795 = vmatpush1.bf16.msra.mxu0 %v686
    %796 = vmatprep.subr.bf16.mxu0 %v691
    %797 = vmatpush1.bf16.msra.mxu0 %v690
    %798 = vmatprep.subr.bf16.mxu0 %v695
    %799 = vmatpush1.bf16.msra.mxu0 %v694
    %800 = vmatprep.subr.bf16.mxu0 %v699
    %801 = vmatpush1.bf16.msra.mxu0 %v698
    %802 = vmatprep.subr.bf16.mxu0 %v703
    %803 = vmatpush1.bf16.msra.mxu0 %v702
    %804 = vmatprep.subr.bf16.mxu0 %v707
    %805 = vmatpush1.bf16.msra.mxu0 %v706
    %806 = vmatprep.mubr.bf16.mxu0 %v368
    %807 = vmatmul.mubr.bf16.gmra.mrb[0].mxu0 %v367
    %v808 = vpop.f32.mrb[0].mxu0
    %v809 = vadd.f32 %v437, %v808
    %v810 = vpop.f32.mrb[0].mxu0
    %v811 = vadd.f32 %v441, %v810
    %v812 = vpop.f32.mrb[0].mxu0
    %v813 = vadd.f32 %v437, %v812
    %v814 = vpop.f32.mrb[0].mxu0
    %v815 = vadd.f32 %v441, %v814
    %816 = vdwg.mxu0
    %817 = vmatprep.subr.bf16.mxu0 %v649
    %818 = vmatpush1.bf16.msra.mxu0 %v648
    %819 = vmatprep.subr.bf16.mxu0 %v653
    %820 = vmatpush1.bf16.msra.mxu0 %v652
    %821 = vmatprep.subr.bf16.mxu0 %v657
    %822 = vmatpush1.bf16.msra.mxu0 %v656
    %823 = vmatprep.subr.bf16.mxu0 %v661
    %824 = vmatpush1.bf16.msra.mxu0 %v660
    %825 = vmatprep.subr.bf16.mxu0 %v665
    %826 = vmatpush1.bf16.msra.mxu0 %v664
    %827 = vmatprep.subr.bf16.mxu0 %v669
    %828 = vmatpush1.bf16.msra.mxu0 %v668
    %829 = vmatprep.subr.bf16.mxu0 %v673
    %830 = vmatpush1.bf16.msra.mxu0 %v672
    %831 = vmatprep.subr.bf16.mxu0 %v677
    %832 = vmatpush1.bf16.msra.mxu0 %v676
    %833 = vmatprep.subr.bf16.mxu0 %v681
    %834 = vmatpush1.bf16.msra.mxu0 %v680
    %835 = vmatprep.subr.bf16.mxu0 %v685
    %836 = vmatpush1.bf16.msra.mxu0 %v684
    %837 = vmatprep.subr.bf16.mxu0 %v689
    %838 = vmatpush1.bf16.msra.mxu0 %v688
    %839 = vmatprep.subr.bf16.mxu0 %v693
    %840 = vmatpush1.bf16.msra.mxu0 %v692
    %841 = vmatprep.subr.bf16.mxu0 %v697
    %842 = vmatpush1.bf16.msra.mxu0 %v696
    %843 = vmatprep.subr.bf16.mxu0 %v701
    %844 = vmatpush1.bf16.msra.mxu0 %v700
    %845 = vmatprep.subr.bf16.mxu0 %v705
    %846 = vmatpush1.bf16.msra.mxu0 %v704
    %847 = vmatprep.subr.bf16.mxu0 %v709
    %848 = vmatpush1.bf16.msra.mxu0 %v708
    %849 = vmatprep.mubr.bf16.mxu0 %v368
    %850 = vmatmul.mubr.bf16.gmra.mrb[0].mxu0 %v367
    %v851 = vpop.f32.mrb[0].mxu0
    %v852 = vadd.f32 %v445, %v851
    %v853 = vpop.f32.mrb[0].mxu0
    %v854 = vadd.f32 %v449, %v853
    %v855 = vpop.f32.mrb[0].mxu0
    %v856 = vadd.f32 %v445, %v855
    %v857 = vpop.f32.mrb[0].mxu0
    %v858 = vadd.f32 %v449, %v857
    %859 = vdwg.mxu0
    %v860 = vadd.f32 %v809, %v811
    %v861 = vadd.f32 %v860, %v852
    %v862 = vadd.f32 %v861, %v854
    %863 = vadd.xlane.f32.xlu0 %v862
    %v864 = vpop.xlane.xlu0 %863
    %v865 = vadd.f32 %v813, %v815
    %v866 = vadd.f32 %v865, %v856
    %v867 = vadd.f32 %v866, %v858
    %868 = vadd.xlane.f32.xlu0 %v867
    %v869 = vpop.xlane.xlu0 %868
    %v870 = vrcp.pop 512.0
    %v871 = vmul.f32 %v864, %v870
    %v872 = vmul.f32 %v869, %v870
    %v873 = vsub.f32 %v809, %v871
    %v874 = vsub.f32 %v811, %v871
    %v875 = vsub.f32 %v852, %v871
    %v876 = vsub.f32 %v854, %v871
    %v877 = vsub.f32 %v813, %v872
    %v878 = vsub.f32 %v815, %v872
    %v879 = vsub.f32 %v856, %v872
    %v880 = vsub.f32 %v858, %v872
    %v881 = vmul.f32 %v873, %v873
    %v882 = vmul.f32 %v874, %v874
    %v883 = vmul.f32 %v875, %v875
    %v884 = vmul.f32 %v876, %v876
    %v885 = vmul.f32 %v877, %v877
    %v886 = vmul.f32 %v878, %v878
    %v887 = vmul.f32 %v879, %v879
    %v888 = vmul.f32 %v880, %v880
    %v889 = vadd.f32 %v881, %v882
    %v890 = vadd.f32 %v889, %v883
    %v891 = vadd.f32 %v890, %v884
    %892 = vadd.xlane.f32.xlu0 %v891
    %v893 = vpop.xlane.xlu0 %892
    %v894 = vadd.f32 %v885, %v886
    %v895 = vadd.f32 %v894, %v887
    %v896 = vadd.f32 %v895, %v888
    %897 = vadd.xlane.f32.xlu0 %v896
    %v898 = vpop.xlane.xlu0 %897
    %v899 = vmul.f32 %v893, %v870
    %v900 = vmul.f32 %v898, %v870
    %v901 = vadd.f32 %v899, 1e-05
    %v902 = vadd.f32 %v900, 1e-05
    %v903 = vrsqrt.pop %v901
    %v904 = vrsqrt.pop %v902
    %v905 = vmul.f32 %v873, %v903
    %v906 = vmul.f32 %v874, %v903
    %v907 = vmul.f32 %v875, %v903
    %v908 = vmul.f32 %v876, %v903
    %v909 = vmul.f32 %v877, %v904
    %v910 = vmul.f32 %v878, %v904
    %v911 = vmul.f32 %v879, %v904
    %v912 = vmul.f32 %v880, %v904
    %v914 = vlaneseq
    %v915 = vshrl.u32 %v914, 7
    %v916 = vsub.s32 0, %v915
    %v917 = vrot.slane %v127, %v916
    %v918 = vlaneseq
    %v919 = vshrl.u32 %v918, 7
    %v920 = vsub.s32 1, %v919
    %v921 = vrot.slane %v127, %v920
    %v922 = vlaneseq
    %v923 = vshrl.u32 %v922, 7
    %v924 = vsub.s32 2, %v923
    %v925 = vrot.slane %v127, %v924
    %v926 = vlaneseq
    %v927 = vshrl.u32 %v926, 7
    %v928 = vsub.s32 3, %v927
    %v929 = vrot.slane %v127, %v928
    %v934 = vmul.f32 %v905, %v917
    %v935 = vmul.f32 %v906, %v921
    %v936 = vmul.f32 %v907, %v925
    %v937 = vmul.f32 %v908, %v929
    %v938 = vmul.f32 %v909, %v917
    %v939 = vmul.f32 %v910, %v921
    %v940 = vmul.f32 %v911, %v925
    %v941 = vmul.f32 %v912, %v929
    %v943 = vlaneseq
    %v944 = vshrl.u32 %v943, 7
    %v945 = vsub.s32 0, %v944
    %v946 = vrot.slane %v129, %v945
    %v947 = vlaneseq
    %v948 = vshrl.u32 %v947, 7
    %v949 = vsub.s32 1, %v948
    %v950 = vrot.slane %v129, %v949
    %v951 = vlaneseq
    %v952 = vshrl.u32 %v951, 7
    %v953 = vsub.s32 2, %v952
    %v954 = vrot.slane %v129, %v953
    %v955 = vlaneseq
    %v956 = vshrl.u32 %v955, 7
    %v957 = vsub.s32 3, %v956
    %v958 = vrot.slane %v129, %v957
    %v963 = vadd.f32 %v934, %v946
    %v964 = vadd.f32 %v935, %v950
    %v965 = vadd.f32 %v936, %v954
    %v966 = vadd.f32 %v937, %v958
    %v967 = vadd.f32 %v938, %v946
    %v968 = vadd.f32 %v939, %v950
    %v969 = vadd.f32 %v940, %v954
    %v970 = vadd.f32 %v941, %v958
    %v971 = vpack.c.bf16 %v967, %v963
    %v972 = vpack.c.bf16 %v968, %v964
    %v973 = vpack.c.bf16 %v969, %v965
    %v974 = vpack.c.bf16 %v970, %v966
    %v975 = vmul.bf16 %v971, 1056980736
    %v976 = vmul.bf16 %v972, 1056980736
    %v977 = vmul.bf16 %v973, 1056980736
    %v978 = vmul.bf16 %v974, 1056980736
    %v979 = vmul.bf16 %v971, 1027030327
    %v980 = vmul.bf16 %v972, 1027030327
    %v981 = vmul.bf16 %v973, 1027030327
    %v982 = vmul.bf16 %v974, 1027030327
    %v983 = vmul.bf16 %v979, %v971
    %v984 = vmul.bf16 %v980, %v972
    %v985 = vmul.bf16 %v981, %v973
    %v986 = vmul.bf16 %v982, %v974
    %v987 = vmul.bf16 %v983, %v971
    %v988 = vmul.bf16 %v984, %v972
    %v989 = vmul.bf16 %v985, %v973
    %v990 = vmul.bf16 %v986, %v974
    %v991 = vadd.bf16 %v971, %v987
    %v992 = vadd.bf16 %v972, %v988
    %v993 = vadd.bf16 %v973, %v989
    %v994 = vadd.bf16 %v974, %v990
    %v995 = vmul.bf16 %v991, 1061961548
    %v996 = vmul.bf16 %v992, 1061961548
    %v997 = vmul.bf16 %v993, 1061961548
    %v998 = vmul.bf16 %v994, 1061961548
    %v999 = vtanh.bf16.pop %v995
    %v1000 = vtanh.bf16.pop %v996
    %v1001 = vtanh.bf16.pop %v997
    %v1002 = vtanh.bf16.pop %v998
    %v1003 = vadd.bf16 %v999, 1065369472
    %v1004 = vadd.bf16 %v1000, 1065369472
    %v1005 = vadd.bf16 %v1001, 1065369472
    %v1006 = vadd.bf16 %v1002, 1065369472
    %v1007 = vmul.bf16 %v975, %v1003
    %v1008 = vmul.bf16 %v976, %v1004
    %v1009 = vmul.bf16 %v977, %v1005
    %v1010 = vmul.bf16 %v978, %v1006
    %v1011 = vld [vmem:[#allocation8] sm:$0xff]
    %v1012 = vld [vmem:[#allocation8 + $0x8] sm:$0xff]
    %v1013 = vld [vmem:[#allocation8 + $0x10] sm:$0xff]
    %v1014 = vld [vmem:[#allocation8 + $0x18] sm:$0xff]
    %v1015 = vld [vmem:[#allocation8 + $0x20] sm:$0xff]
    %v1016 = vld [vmem:[#allocation8 + $0x28] sm:$0xff]
    %v1017 = vld [vmem:[#allocation8 + $0x30] sm:$0xff]
    %v1018 = vld [vmem:[#allocation8 + $0x38] sm:$0xff]
    %v1019 = vld [vmem:[#allocation8 + $0x40] sm:$0xff]
    %v1020 = vld [vmem:[#allocation8 + $0x48] sm:$0xff]
    %v1021 = vld [vmem:[#allocation8 + $0x50] sm:$0xff]
    %v1022 = vld [vmem:[#allocation8 + $0x58] sm:$0xff]
    %v1023 = vld [vmem:[#allocation8 + $0x60] sm:$0xff]
    %v1024 = vld [vmem:[#allocation8 + $0x68] sm:$0xff]
    %v1025 = vld [vmem:[#allocation8 + $0x70] sm:$0xff]
    %v1026 = vld [vmem:[#allocation8 + $0x78] sm:$0xff]
    %v1027 = vld [vmem:[#allocation8 + $0x80] sm:$0xff]
    %v1028 = vld [vmem:[#allocation8 + $0x88] sm:$0xff]
    %v1029 = vld [vmem:[#allocation8 + $0x90] sm:$0xff]
    %v1030 = vld [vmem:[#allocation8 + $0x98] sm:$0xff]
    %v1031 = vld [vmem:[#allocation8 + $0xa0] sm:$0xff]
    %v1032 = vld [vmem:[#allocation8 + $0xa8] sm:$0xff]
    %v1033 = vld [vmem:[#allocation8 + $0xb0] sm:$0xff]
    %v1034 = vld [vmem:[#allocation8 + $0xb8] sm:$0xff]
    %v1035 = vld [vmem:[#allocation8 + $0xc0] sm:$0xff]
    %v1036 = vld [vmem:[#allocation8 + $0xc8] sm:$0xff]
    %v1037 = vld [vmem:[#allocation8 + $0xd0] sm:$0xff]
    %v1038 = vld [vmem:[#allocation8 + $0xd8] sm:$0xff]
    %v1039 = vld [vmem:[#allocation8 + $0xe0] sm:$0xff]
    %v1040 = vld [vmem:[#allocation8 + $0xe8] sm:$0xff]
    %v1041 = vld [vmem:[#allocation8 + $0xf0] sm:$0xff]
    %v1042 = vld [vmem:[#allocation8 + $0xf8] sm:$0xff]
    %v1043 = vld [vmem:[#allocation8 + $0x100] sm:$0xff]
    %v1044 = vld [vmem:[#allocation8 + $0x108] sm:$0xff]
    %v1045 = vld [vmem:[#allocation8 + $0x110] sm:$0xff]
    %v1046 = vld [vmem:[#allocation8 + $0x118] sm:$0xff]
    %v1047 = vld [vmem:[#allocation8 + $0x120] sm:$0xff]
    %v1048 = vld [vmem:[#allocation8 + $0x128] sm:$0xff]
    %v1049 = vld [vmem:[#allocation8 + $0x130] sm:$0xff]
    %v1050 = vld [vmem:[#allocation8 + $0x138] sm:$0xff]
    %v1051 = vld [vmem:[#allocation8 + $0x140] sm:$0xff]
    %v1052 = vld [vmem:[#allocation8 + $0x148] sm:$0xff]
    %v1053 = vld [vmem:[#allocation8 + $0x150] sm:$0xff]
    %v1054 = vld [vmem:[#allocation8 + $0x158] sm:$0xff]
    %v1055 = vld [vmem:[#allocation8 + $0x160] sm:$0xff]
    %v1056 = vld [vmem:[#allocation8 + $0x168] sm:$0xff]
    %v1057 = vld [vmem:[#allocation8 + $0x170] sm:$0xff]
    %v1058 = vld [vmem:[#allocation8 + $0x178] sm:$0xff]
    %v1059 = vld [vmem:[#allocation8 + $0x180] sm:$0xff]
    %v1060 = vld [vmem:[#allocation8 + $0x188] sm:$0xff]
    %v1061 = vld [vmem:[#allocation8 + $0x190] sm:$0xff]
    %v1062 = vld [vmem:[#allocation8 + $0x198] sm:$0xff]
    %v1063 = vld [vmem:[#allocation8 + $0x1a0] sm:$0xff]
    %v1064 = vld [vmem:[#allocation8 + $0x1a8] sm:$0xff]
    %v1065 = vld [vmem:[#allocation8 + $0x1b0] sm:$0xff]
    %v1066 = vld [vmem:[#allocation8 + $0x1b8] sm:$0xff]
    %v1067 = vld [vmem:[#allocation8 + $0x1c0] sm:$0xff]
    %v1068 = vld [vmem:[#allocation8 + $0x1c8] sm:$0xff]
    %v1069 = vld [vmem:[#allocation8 + $0x1d0] sm:$0xff]
    %v1070 = vld [vmem:[#allocation8 + $0x1d8] sm:$0xff]
    %v1071 = vld [vmem:[#allocation8 + $0x1e0] sm:$0xff]
    %v1072 = vld [vmem:[#allocation8 + $0x1e8] sm:$0xff]
    %v1073 = vld [vmem:[#allocation8 + $0x1f0] sm:$0xff]
    %v1074 = vld [vmem:[#allocation8 + $0x1f8] sm:$0xff]
    %v1076 = vlaneseq
    %v1077 = vshrl.u32 %v1076, 7
    %v1078 = vsub.s32 0, %v1077
    %v1079 = vrot.slane %v124, %v1078
    %v1080 = vlaneseq
    %v1081 = vshrl.u32 %v1080, 7
    %v1082 = vsub.s32 1, %v1081
    %v1083 = vrot.slane %v124, %v1082
    %v1150 = vunpack.c.l.b16 %v1011
    %v1151 = vunpack.c.h.b16 %v1011
    %v1152 = vunpack.c.l.b16 %v1012
    %v1153 = vunpack.c.h.b16 %v1012
    %v1154 = vunpack.c.l.b16 %v1013
    %v1155 = vunpack.c.h.b16 %v1013
    %v1156 = vunpack.c.l.b16 %v1014
    %v1157 = vunpack.c.h.b16 %v1014
    %v1158 = vunpack.c.l.b16 %v1015
    %v1159 = vunpack.c.h.b16 %v1015
    %v1160 = vunpack.c.l.b16 %v1016
    %v1161 = vunpack.c.h.b16 %v1016
    %v1162 = vunpack.c.l.b16 %v1017
    %v1163 = vunpack.c.h.b16 %v1017
    %v1164 = vunpack.c.l.b16 %v1018
    %v1165 = vunpack.c.h.b16 %v1018
    %v1166 = vunpack.c.l.b16 %v1019
    %v1167 = vunpack.c.h.b16 %v1019
    %v1168 = vunpack.c.l.b16 %v1020
    %v1169 = vunpack.c.h.b16 %v1020
    %v1170 = vunpack.c.l.b16 %v1021
    %v1171 = vunpack.c.h.b16 %v1021
    %v1172 = vunpack.c.l.b16 %v1022
    %v1173 = vunpack.c.h.b16 %v1022
    %v1174 = vunpack.c.l.b16 %v1023
    %v1175 = vunpack.c.h.b16 %v1023
    %v1176 = vunpack.c.l.b16 %v1024
    %v1177 = vunpack.c.h.b16 %v1024
    %v1178 = vunpack.c.l.b16 %v1025
    %v1179 = vunpack.c.h.b16 %v1025
    %v1180 = vunpack.c.l.b16 %v1026
    %v1181 = vunpack.c.h.b16 %v1026
    %v1182 = vunpack.c.l.b16 %v1027
    %v1183 = vunpack.c.h.b16 %v1027
    %v1184 = vunpack.c.l.b16 %v1028
    %v1185 = vunpack.c.h.b16 %v1028
    %v1186 = vunpack.c.l.b16 %v1029
    %v1187 = vunpack.c.h.b16 %v1029
    %v1188 = vunpack.c.l.b16 %v1030
    %v1189 = vunpack.c.h.b16 %v1030
    %v1190 = vunpack.c.l.b16 %v1031
    %v1191 = vunpack.c.h.b16 %v1031
    %v1192 = vunpack.c.l.b16 %v1032
    %v1193 = vunpack.c.h.b16 %v1032
    %v1194 = vunpack.c.l.b16 %v1033
    %v1195 = vunpack.c.h.b16 %v1033
    %v1196 = vunpack.c.l.b16 %v1034
    %v1197 = vunpack.c.h.b16 %v1034
    %v1198 = vunpack.c.l.b16 %v1035
    %v1199 = vunpack.c.h.b16 %v1035
    %v1200 = vunpack.c.l.b16 %v1036
    %v1201 = vunpack.c.h.b16 %v1036
    %v1202 = vunpack.c.l.b16 %v1037
    %v1203 = vunpack.c.h.b16 %v1037
    %v1204 = vunpack.c.l.b16 %v1038
    %v1205 = vunpack.c.h.b16 %v1038
    %v1206 = vunpack.c.l.b16 %v1039
    %v1207 = vunpack.c.h.b16 %v1039
    %v1208 = vunpack.c.l.b16 %v1040
    %v1209 = vunpack.c.h.b16 %v1040
    %v1210 = vunpack.c.l.b16 %v1041
    %v1211 = vunpack.c.h.b16 %v1041
    %v1212 = vunpack.c.l.b16 %v1042
    %v1213 = vunpack.c.h.b16 %v1042
    %v1214 = vunpack.c.l.b16 %v1043
    %v1215 = vunpack.c.h.b16 %v1043
    %v1216 = vunpack.c.l.b16 %v1044
    %v1217 = vunpack.c.h.b16 %v1044
    %v1218 = vunpack.c.l.b16 %v1045
    %v1219 = vunpack.c.h.b16 %v1045
    %v1220 = vunpack.c.l.b16 %v1046
    %v1221 = vunpack.c.h.b16 %v1046
    %v1222 = vunpack.c.l.b16 %v1047
    %v1223 = vunpack.c.h.b16 %v1047
    %v1224 = vunpack.c.l.b16 %v1048
    %v1225 = vunpack.c.h.b16 %v1048
    %v1226 = vunpack.c.l.b16 %v1049
    %v1227 = vunpack.c.h.b16 %v1049
    %v1228 = vunpack.c.l.b16 %v1050
    %v1229 = vunpack.c.h.b16 %v1050
    %v1230 = vunpack.c.l.b16 %v1051
    %v1231 = vunpack.c.h.b16 %v1051
    %v1232 = vunpack.c.l.b16 %v1052
    %v1233 = vunpack.c.h.b16 %v1052
    %v1234 = vunpack.c.l.b16 %v1053
    %v1235 = vunpack.c.h.b16 %v1053
    %v1236 = vunpack.c.l.b16 %v1054
    %v1237 = vunpack.c.h.b16 %v1054
    %v1238 = vunpack.c.l.b16 %v1055
    %v1239 = vunpack.c.h.b16 %v1055
    %v1240 = vunpack.c.l.b16 %v1056
    %v1241 = vunpack.c.h.b16 %v1056
    %v1242 = vunpack.c.l.b16 %v1057
    %v1243 = vunpack.c.h.b16 %v1057
    %v1244 = vunpack.c.l.b16 %v1058
    %v1245 = vunpack.c.h.b16 %v1058
    %v1246 = vunpack.c.l.b16 %v1059
    %v1247 = vunpack.c.h.b16 %v1059
    %v1248 = vunpack.c.l.b16 %v1060
    %v1249 = vunpack.c.h.b16 %v1060
    %v1250 = vunpack.c.l.b16 %v1061
    %v1251 = vunpack.c.h.b16 %v1061
    %v1252 = vunpack.c.l.b16 %v1062
    %v1253 = vunpack.c.h.b16 %v1062
    %v1254 = vunpack.c.l.b16 %v1063
    %v1255 = vunpack.c.h.b16 %v1063
    %v1256 = vunpack.c.l.b16 %v1064
    %v1257 = vunpack.c.h.b16 %v1064
    %v1258 = vunpack.c.l.b16 %v1065
    %v1259 = vunpack.c.h.b16 %v1065
    %v1260 = vunpack.c.l.b16 %v1066
    %v1261 = vunpack.c.h.b16 %v1066
    %v1262 = vunpack.c.l.b16 %v1067
    %v1263 = vunpack.c.h.b16 %v1067
    %v1264 = vunpack.c.l.b16 %v1068
    %v1265 = vunpack.c.h.b16 %v1068
    %v1266 = vunpack.c.l.b16 %v1069
    %v1267 = vunpack.c.h.b16 %v1069
    %v1268 = vunpack.c.l.b16 %v1070
    %v1269 = vunpack.c.h.b16 %v1070
    %v1270 = vunpack.c.l.b16 %v1071
    %v1271 = vunpack.c.h.b16 %v1071
    %v1272 = vunpack.c.l.b16 %v1072
    %v1273 = vunpack.c.h.b16 %v1072
    %v1274 = vunpack.c.l.b16 %v1073
    %v1275 = vunpack.c.h.b16 %v1073
    %v1276 = vunpack.c.l.b16 %v1074
    %v1277 = vunpack.c.h.b16 %v1074
    %v1278 = vpack.c.b16 %v1152, %v1150
    %v1279 = vpack.c.b16 %v1153, %v1151
    %v1280 = vpack.c.b16 %v1156, %v1154
    %v1281 = vpack.c.b16 %v1157, %v1155
    %v1282 = vpack.c.b16 %v1160, %v1158
    %v1283 = vpack.c.b16 %v1161, %v1159
    %v1284 = vpack.c.b16 %v1164, %v1162
    %v1285 = vpack.c.b16 %v1165, %v1163
    %v1286 = vpack.c.b16 %v1168, %v1166
    %v1287 = vpack.c.b16 %v1169, %v1167
    %v1288 = vpack.c.b16 %v1172, %v1170
    %v1289 = vpack.c.b16 %v1173, %v1171
    %v1290 = vpack.c.b16 %v1176, %v1174
    %v1291 = vpack.c.b16 %v1177, %v1175
    %v1292 = vpack.c.b16 %v1180, %v1178
    %v1293 = vpack.c.b16 %v1181, %v1179
    %v1294 = vpack.c.b16 %v1184, %v1182
    %v1295 = vpack.c.b16 %v1185, %v1183
    %v1296 = vpack.c.b16 %v1188, %v1186
    %v1297 = vpack.c.b16 %v1189, %v1187
    %v1298 = vpack.c.b16 %v1192, %v1190
    %v1299 = vpack.c.b16 %v1193, %v1191
    %v1300 = vpack.c.b16 %v1196, %v1194
    %v1301 = vpack.c.b16 %v1197, %v1195
    %v1302 = vpack.c.b16 %v1200, %v1198
    %v1303 = vpack.c.b16 %v1201, %v1199
    %v1304 = vpack.c.b16 %v1204, %v1202
    %v1305 = vpack.c.b16 %v1205, %v1203
    %v1306 = vpack.c.b16 %v1208, %v1206
    %v1307 = vpack.c.b16 %v1209, %v1207
    %v1308 = vpack.c.b16 %v1212, %v1210
    %v1309 = vpack.c.b16 %v1213, %v1211
    %v1310 = vpack.c.b16 %v1216, %v1214
    %v1311 = vpack.c.b16 %v1217, %v1215
    %v1312 = vpack.c.b16 %v1220, %v1218
    %v1313 = vpack.c.b16 %v1221, %v1219
    %v1314 = vpack.c.b16 %v1224, %v1222
    %v1315 = vpack.c.b16 %v1225, %v1223
    %v1316 = vpack.c.b16 %v1228, %v1226
    %v1317 = vpack.c.b16 %v1229, %v1227
    %v1318 = vpack.c.b16 %v1232, %v1230
    %v1319 = vpack.c.b16 %v1233, %v1231
    %v1320 = vpack.c.b16 %v1236, %v1234
    %v1321 = vpack.c.b16 %v1237, %v1235
    %v1322 = vpack.c.b16 %v1240, %v1238
    %v1323 = vpack.c.b16 %v1241, %v1239
    %v1324 = vpack.c.b16 %v1244, %v1242
    %v1325 = vpack.c.b16 %v1245, %v1243
    %v1326 = vpack.c.b16 %v1248, %v1246
    %v1327 = vpack.c.b16 %v1249, %v1247
    %v1328 = vpack.c.b16 %v1252, %v1250
    %v1329 = vpack.c.b16 %v1253, %v1251
    %v1330 = vpack.c.b16 %v1256, %v1254
    %v1331 = vpack.c.b16 %v1257, %v1255
    %v1332 = vpack.c.b16 %v1260, %v1258
    %v1333 = vpack.c.b16 %v1261, %v1259
    %v1334 = vpack.c.b16 %v1264, %v1262
    %v1335 = vpack.c.b16 %v1265, %v1263
    %v1336 = vpack.c.b16 %v1268, %v1266
    %v1337 = vpack.c.b16 %v1269, %v1267
    %v1338 = vpack.c.b16 %v1272, %v1270
    %v1339 = vpack.c.b16 %v1273, %v1271
    %v1340 = vpack.c.b16 %v1276, %v1274
    %v1341 = vpack.c.b16 %v1277, %v1275
    %1406 = vmatprep.subr.bf16.mxu0 %v1279
    %1407 = vmatpush1.bf16.msra.mxu0 %v1278
    %1408 = vmatprep.subr.bf16.mxu0 %v1281
    %1409 = vmatpush1.bf16.msra.mxu0 %v1280
    %1410 = vmatprep.subr.bf16.mxu0 %v1283
    %1411 = vmatpush1.bf16.msra.mxu0 %v1282
    %1412 = vmatprep.subr.bf16.mxu0 %v1285
    %1413 = vmatpush1.bf16.msra.mxu0 %v1284
    %1414 = vmatprep.subr.bf16.mxu0 %v1287
    %1415 = vmatpush1.bf16.msra.mxu0 %v1286
    %1416 = vmatprep.subr.bf16.mxu0 %v1289
    %1417 = vmatpush1.bf16.msra.mxu0 %v1288
    %1418 = vmatprep.subr.bf16.mxu0 %v1291
    %1419 = vmatpush1.bf16.msra.mxu0 %v1290
    %1420 = vmatprep.subr.bf16.mxu0 %v1293
    %1421 = vmatpush1.bf16.msra.mxu0 %v1292
    %1422 = vmatprep.subr.bf16.mxu0 %v1295
    %1423 = vmatpush1.bf16.msra.mxu0 %v1294
    %1424 = vmatprep.subr.bf16.mxu0 %v1297
    %1425 = vmatpush1.bf16.msra.mxu0 %v1296
    %1426 = vmatprep.subr.bf16.mxu0 %v1299
    %1427 = vmatpush1.bf16.msra.mxu0 %v1298
    %1428 = vmatprep.subr.bf16.mxu0 %v1301
    %1429 = vmatpush1.bf16.msra.mxu0 %v1300
    %1430 = vmatprep.subr.bf16.mxu0 %v1303
    %1431 = vmatpush1.bf16.msra.mxu0 %v1302
    %1432 = vmatprep.subr.bf16.mxu0 %v1305
    %1433 = vmatpush1.bf16.msra.mxu0 %v1304
    %1434 = vmatprep.subr.bf16.mxu0 %v1307
    %1435 = vmatpush1.bf16.msra.mxu0 %v1306
    %1436 = vmatprep.subr.bf16.mxu0 %v1309
    %1437 = vmatpush1.bf16.msra.mxu0 %v1308
    %1438 = vmatprep.mubr.bf16.mxu0 %v1008
    %1439 = vmatmul.mubr.bf16.gmra.mrb[0].mxu0 %v1007
    %v1440 = vpop.f32.mrb[0].mxu0
    %v1441 = vadd.f32 %v1079, %v1440
    %v1442 = vpop.f32.mrb[0].mxu0
    %v1443 = vadd.f32 %v1083, %v1442
    %v1444 = vpop.f32.mrb[0].mxu0
    %v1445 = vadd.f32 %v1079, %v1444
    %v1446 = vpop.f32.mrb[0].mxu0
    %v1447 = vadd.f32 %v1083, %v1446
    %1448 = vdwg.mxu0
    %1449 = vmatprep.subr.bf16.mxu0 %v1311
    %1450 = vmatpush1.bf16.msra.mxu0 %v1310
    %1451 = vmatprep.subr.bf16.mxu0 %v1313
    %1452 = vmatpush1.bf16.msra.mxu0 %v1312
    %1453 = vmatprep.subr.bf16.mxu0 %v1315
    %1454 = vmatpush1.bf16.msra.mxu0 %v1314
    %1455 = vmatprep.subr.bf16.mxu0 %v1317
    %1456 = vmatpush1.bf16.msra.mxu0 %v1316
    %1457 = vmatprep.subr.bf16.mxu0 %v1319
    %1458 = vmatpush1.bf16.msra.mxu0 %v1318
    %1459 = vmatprep.subr.bf16.mxu0 %v1321
    %1460 = vmatpush1.bf16.msra.mxu0 %v1320
    %1461 = vmatprep.subr.bf16.mxu0 %v1323
    %1462 = vmatpush1.bf16.msra.mxu0 %v1322
    %1463 = vmatprep.subr.bf16.mxu0 %v1325
    %1464 = vmatpush1.bf16.msra.mxu0 %v1324
    %1465 = vmatprep.subr.bf16.mxu0 %v1327
    %1466 = vmatpush1.bf16.msra.mxu0 %v1326
    %1467 = vmatprep.subr.bf16.mxu0 %v1329
    %1468 = vmatpush1.bf16.msra.mxu0 %v1328
    %1469 = vmatprep.subr.bf16.mxu0 %v1331
    %1470 = vmatpush1.bf16.msra.mxu0 %v1330
    %1471 = vmatprep.subr.bf16.mxu0 %v1333
    %1472 = vmatpush1.bf16.msra.mxu0 %v1332
    %1473 = vmatprep.subr.bf16.mxu0 %v1335
    %1474 = vmatpush1.bf16.msra.mxu0 %v1334
    %1475 = vmatprep.subr.bf16.mxu0 %v1337
    %1476 = vmatpush1.bf16.msra.mxu0 %v1336
    %1477 = vmatprep.subr.bf16.mxu0 %v1339
    %1478 = vmatpush1.bf16.msra.mxu0 %v1338
    %1479 = vmatprep.subr.bf16.mxu0 %v1341
    %1480 = vmatpush1.bf16.msra.mxu0 %v1340
    %1481 = vmatprep.mubr.bf16.mxu0 %v1010
    %1482 = vmatmul.mubr.bf16.gmra.mrb[0].mxu0 %v1009
    %v1483 = vpop.f32.mrb[0].mxu0
    %v1484 = vadd.f32 %v1441, %v1483
    %v1485 = vpop.f32.mrb[0].mxu0
    %v1486 = vadd.f32 %v1443, %v1485
    %v1487 = vpop.f32.mrb[0].mxu0
    %v1488 = vadd.f32 %v1445, %v1487
    %v1489 = vpop.f32.mrb[0].mxu0
    %v1490 = vadd.f32 %v1447, %v1489
    %1491 = vdwg.mxu0
    %v1492 = vpack.c.bf16 %v1488, %v1484
    %v1493 = vpack.c.bf16 %v1490, %v1486
    %v1494 = vld [vmem:[#allocation10] sm:$0xf]
    %v1495 = vld [vmem:[#allocation10 + $0x4] sm:$0xf]
    %v1496 = vld [vmem:[#allocation10 + $0x8] sm:$0xf]
    %v1497 = vld [vmem:[#allocation10 + $0xc] sm:$0xf]
    %v1498 = vld [vmem:[#allocation10 + $0x10] sm:$0xf]
    %v1499 = vld [vmem:[#allocation10 + $0x14] sm:$0xf]
    %v1500 = vld [vmem:[#allocation10 + $0x18] sm:$0xf]
    %v1501 = vld [vmem:[#allocation10 + $0x1c] sm:$0xf]
    %v1502 = vld [vmem:[#allocation10 + $0x20] sm:$0xf]
    %v1503 = vld [vmem:[#allocation10 + $0x24] sm:$0xf]
    %v1504 = vld [vmem:[#allocation10 + $0x28] sm:$0xf]
    %v1505 = vld [vmem:[#allocation10 + $0x2c] sm:$0xf]
    %v1506 = vld [vmem:[#allocation10 + $0x30] sm:$0xf]
    %v1507 = vld [vmem:[#allocation10 + $0x34] sm:$0xf]
    %v1508 = vld [vmem:[#allocation10 + $0x38] sm:$0xf]
    %v1509 = vld [vmem:[#allocation10 + $0x3c] sm:$0xf]
    %v1510 = vld [vmem:[#allocation10 + $0x40] sm:$0xf]
    %v1511 = vld [vmem:[#allocation10 + $0x44] sm:$0xf]
    %v1512 = vld [vmem:[#allocation10 + $0x48] sm:$0xf]
    %v1513 = vld [vmem:[#allocation10 + $0x4c] sm:$0xf]
    %v1514 = vld [vmem:[#allocation10 + $0x50] sm:$0xf]
    %v1515 = vld [vmem:[#allocation10 + $0x54] sm:$0xf]
    %v1516 = vld [vmem:[#allocation10 + $0x58] sm:$0xf]
    %v1517 = vld [vmem:[#allocation10 + $0x5c] sm:$0xf]
    %v1518 = vld [vmem:[#allocation10 + $0x60] sm:$0xf]
    %v1519 = vld [vmem:[#allocation10 + $0x64] sm:$0xf]
    %v1520 = vld [vmem:[#allocation10 + $0x68] sm:$0xf]
    %v1521 = vld [vmem:[#allocation10 + $0x6c] sm:$0xf]
    %v1522 = vld [vmem:[#allocation10 + $0x70] sm:$0xf]
    %v1523 = vld [vmem:[#allocation10 + $0x74] sm:$0xf]
    %v1524 = vld [vmem:[#allocation10 + $0x78] sm:$0xf]
    %v1525 = vld [vmem:[#allocation10 + $0x7c] sm:$0xf]
    %v1526 = vlaneseq
    %v1527 = vshrl.u32 %v1526, 7
    %v1528 = vsub.s32 0, %v1527
    %v1529 = vrot.slane %v130, %v1528
    %v1562 = vunpack.c.l.b16 %v1494
    %v1563 = vunpack.c.l.b16 %v1495
    %v1564 = vunpack.c.l.b16 %v1496
    %v1565 = vunpack.c.l.b16 %v1497
    %v1566 = vunpack.c.l.b16 %v1498
    %v1567 = vunpack.c.l.b16 %v1499
    %v1568 = vunpack.c.l.b16 %v1500
    %v1569 = vunpack.c.l.b16 %v1501
    %v1570 = vunpack.c.l.b16 %v1502
    %v1571 = vunpack.c.l.b16 %v1503
    %v1572 = vunpack.c.l.b16 %v1504
    %v1573 = vunpack.c.l.b16 %v1505
    %v1574 = vunpack.c.l.b16 %v1506
    %v1575 = vunpack.c.l.b16 %v1507
    %v1576 = vunpack.c.l.b16 %v1508
    %v1577 = vunpack.c.l.b16 %v1509
    %v1578 = vunpack.c.l.b16 %v1510
    %v1579 = vunpack.c.l.b16 %v1511
    %v1580 = vunpack.c.l.b16 %v1512
    %v1581 = vunpack.c.l.b16 %v1513
    %v1582 = vunpack.c.l.b16 %v1514
    %v1583 = vunpack.c.l.b16 %v1515
    %v1584 = vunpack.c.l.b16 %v1516
    %v1585 = vunpack.c.l.b16 %v1517
    %v1586 = vunpack.c.l.b16 %v1518
    %v1587 = vunpack.c.l.b16 %v1519
    %v1588 = vunpack.c.l.b16 %v1520
    %v1589 = vunpack.c.l.b16 %v1521
    %v1590 = vunpack.c.l.b16 %v1522
    %v1591 = vunpack.c.l.b16 %v1523
    %v1592 = vunpack.c.l.b16 %v1524
    %v1593 = vunpack.c.l.b16 %v1525
    %v1594 = vpack.c.b16 %v1563, %v1562
    %v1595 = vpack.c.b16 %v1565, %v1564
    %v1596 = vpack.c.b16 %v1567, %v1566
    %v1597 = vpack.c.b16 %v1569, %v1568
    %v1598 = vpack.c.b16 %v1571, %v1570
    %v1599 = vpack.c.b16 %v1573, %v1572
    %v1600 = vpack.c.b16 %v1575, %v1574
    %v1601 = vpack.c.b16 %v1577, %v1576
    %v1602 = vpack.c.b16 %v1579, %v1578
    %v1603 = vpack.c.b16 %v1581, %v1580
    %v1604 = vpack.c.b16 %v1583, %v1582
    %v1605 = vpack.c.b16 %v1585, %v1584
    %v1606 = vpack.c.b16 %v1587, %v1586
    %v1607 = vpack.c.b16 %v1589, %v1588
    %v1608 = vpack.c.b16 %v1591, %v1590
    %v1609 = vpack.c.b16 %v1593, %v1592
    %1626 = vmatprep.subr.bf16.mxu0 0
    %1627 = vmatpush1.bf16.msra.mxu0 %v1594
    %1628 = vmatprep.subr.bf16.mxu0 0
    %1629 = vmatpush1.bf16.msra.mxu0 %v1595
    %1630 = vmatprep.subr.bf16.mxu0 0
    %1631 = vmatpush1.bf16.msra.mxu0 %v1596
    %1632 = vmatprep.subr.bf16.mxu0 0
    %1633 = vmatpush1.bf16.msra.mxu0 %v1597
    %1634 = vmatprep.subr.bf16.mxu0 0
    %1635 = vmatpush1.bf16.msra.mxu0 %v1598
    %1636 = vmatprep.subr.bf16.mxu0 0
    %1637 = vmatpush1.bf16.msra.mxu0 %v1599
    %1638 = vmatprep.subr.bf16.mxu0 0
    %1639 = vmatpush1.bf16.msra.mxu0 %v1600
    %1640 = vmatprep.subr.bf16.mxu0 0
    %1641 = vmatpush1.bf16.msra.mxu0 %v1601
    %1642 = vmatprep.subr.bf16.mxu0 0
    %1643 = vmatpush1.bf16.msra.mxu0 %v1602
    %1644 = vmatprep.subr.bf16.mxu0 0
    %1645 = vmatpush1.bf16.msra.mxu0 %v1603
    %1646 = vmatprep.subr.bf16.mxu0 0
    %1647 = vmatpush1.bf16.msra.mxu0 %v1604
    %1648 = vmatprep.subr.bf16.mxu0 0
    %1649 = vmatpush1.bf16.msra.mxu0 %v1605
    %1650 = vmatprep.subr.bf16.mxu0 0
    %1651 = vmatpush1.bf16.msra.mxu0 %v1606
    %1652 = vmatprep.subr.bf16.mxu0 0
    %1653 = vmatpush1.bf16.msra.mxu0 %v1607
    %1654 = vmatprep.subr.bf16.mxu0 0
    %1655 = vmatpush1.bf16.msra.mxu0 %v1608
    %1656 = vmatprep.subr.bf16.mxu0 0
    %1657 = vmatpush1.bf16.msra.mxu0 %v1609
    %1658 = vmatprep.mubr.bf16.mxu0 %v1493
    %1659 = vmatmul.mubr.bf16.gmra.mrb[0].mxu0 %v1492
    %v1660 = vpop.f32.mrb[0].mxu0
    %v1661 = vadd.f32 %v1529, %v1660
    %v1662 = vpop.f32.mrb[0].mxu0
    %v1663 = vpop.f32.mrb[0].mxu0
    %v1664 = vadd.f32 %v1529, %v1663
    %v1665 = vpop.f32.mrb[0].mxu0
    %1666 = vdwg.mxu0
    %v1667 = vmul.f32 %v1661, 0.5
    %v1668 = vmul.f32 %v1664, 0.5
    %v1669 = vmul.f32 %v1661, 0.044715
    %v1670 = vmul.f32 %v1664, 0.044715
    %v1671 = vmul.f32 %v1669, %v1661
    %v1672 = vmul.f32 %v1670, %v1664
    %v1673 = vmul.f32 %v1671, %v1661
    %v1674 = vmul.f32 %v1672, %v1664
    %v1675 = vadd.f32 %v1661, %v1673
    %v1676 = vadd.f32 %v1664, %v1674
    %v1677 = vmul.f32 %v1675, 0.7978846
    %v1678 = vmul.f32 %v1676, 0.7978846
    %v1679 = vtanh.pop %v1677
    %v1680 = vtanh.pop %v1678
    %v1681 = vadd.f32 %v1679, 1.0
    %v1682 = vadd.f32 %v1680, 1.0
    %v1683 = vmul.f32 %v1667, %v1681
    %v1684 = vmul.f32 %v1668, %v1682
    %v1685 = vlaneseq
    %v1686 = vshrl.u32 %v1685, 7
    %v1687 = vsub.s32 0, %v1686
    %v1688 = vrot.slane %v131, %v1687
    %v1689 = vpack.c.bf16 %v1688, %v1688
    %v1690 = vpack.c.bf16 %v1684, %v1683
    %1691 = vmatprep.subr.bf16.mxu0 0
    %1692 = vmatpush1.bf16.xpose.msra.mxu0 %v1690
    %1693 = vmatprep.subr.bf16.mxu0 0
    %1694 = vmatpush1.bf16.xpose.msra.mxu0 0
    %1695 = vmatprep.subr.bf16.mxu0 0
    %1696 = vmatpush1.bf16.xpose.msra.mxu0 0
    %1697 = vmatprep.subr.bf16.mxu0 0
    %1698 = vmatpush1.bf16.xpose.msra.mxu0 0
    %1699 = vmatprep.subr.bf16.mxu0 0
    %1700 = vmatpush1.bf16.xpose.msra.mxu0 0
    %1701 = vmatprep.subr.bf16.mxu0 0
    %1702 = vmatpush1.bf16.xpose.msra.mxu0 0
    %1703 = vmatprep.subr.bf16.mxu0 0
    %1704 = vmatpush1.bf16.xpose.msra.mxu0 0
    %1705 = vmatprep.subr.bf16.mxu0 0
    %1706 = vmatpush1.bf16.xpose.msra.mxu0 0
    %1707 = vmatprep.subr.bf16.mxu0 0
    %1708 = vmatpush1.bf16.xpose.msra.mxu0 0
    %1709 = vmatprep.subr.bf16.mxu0 0
    %1710 = vmatpush1.bf16.xpose.msra.mxu0 0
    %1711 = vmatprep.subr.bf16.mxu0 0
    %1712 = vmatpush1.bf16.xpose.msra.mxu0 0
    %1713 = vmatprep.subr.bf16.mxu0 0
    %1714 = vmatpush1.bf16.xpose.msra.mxu0 0
    %1715 = vmatprep.subr.bf16.mxu0 0
    %1716 = vmatpush1.bf16.xpose.msra.mxu0 0
    %1717 = vmatprep.subr.bf16.mxu0 0
    %1718 = vmatpush1.bf16.xpose.msra.mxu0 0
    %1719 = vmatprep.subr.bf16.mxu0 0
    %1720 = vmatpush1.bf16.xpose.msra.mxu0 0
    %1721 = vmatprep.subr.bf16.mxu0 0
    %1722 = vmatpush1.bf16.xpose.msra.mxu0 0
    %1723 = vmatprep.mubr.bf16.mxu0 0
    %1724 = vmatmul.mubr.bf16.gmra.mrb[0].mxu0 %v1689
    %v1725 = vpop.f32.mrb[0].mxu0
    %v1726 = vadd.f32 0.0, %v1725
    %v1727 = vpop.f32.mrb[0].mxu0
    %v1728 = vpop.f32.mrb[0].mxu0
    %v1729 = vpop.f32.mrb[0].mxu0
    %1730 = vdwg.mxu0
    %1732 = vset.pattern.permute.xlu0 0
    %1733 = vperm.xlu0 %1732, %v132
    %v1734 = vpop.permute.xlu0 %1733
    %v1736 = vadd.f32 %v1726, %v1734
    %v1737 = vtanh.pop %v1736
    %1738 = vst [vmem:[#allocation14] sm:$0xff] %v1484
    %1739 = vst [vmem:[#allocation14 + $0x8] sm:$0xff] %v1486
    %1740 = vst [vmem:[#allocation14 + $0x10] sm:$0xff] %v1488
    %1741 = vst [vmem:[#allocation14 + $0x18] sm:$0xff] %v1490
    %vm1742 = vcmask 122880
    %1743 = vst.msk [vmem:[#allocation13] sm:$0x1] %vm1742, %v1737
    // Predicated region
    $region58: #{tpu_custom_call.1} parent=1 // pred_check
      _
    $region59: #{tpu_custom_call.1} parent=1 // pred_check_branch
      %1745 = sbr.rel (0) target = $region61
    $region60: #{tpu_custom_call.1} parent=1 // pred_region
      %s1747 = ssub.s32 16, 16
      %1748 = vsyncadd [#allocation4], %s1747
      %s1750 = sshll.u32 [#allocation13], 4
      %s1751 = int_to_ptr.vmem [resolvable:$true] %s1750
      %1753 = dma.vmem_to_hbm [thread:$0]  %s1751, 16, %s8, [#allocation4]
    $region61: #{tpu_custom_call.1} parent=1 // pred_fallthru
      _
    // Predicated region
    $region62: #{tpu_custom_call.1} parent=1 // pred_check
      _
    $region63: #{tpu_custom_call.1} parent=1 // pred_check_branch
      %1755 = sbr.rel (0) target = $region65
    $region64: #{tpu_custom_call.1} parent=1 // pred_region
      %s1757 = ssub.s32 512, 512
      %1758 = vsyncadd [#allocation15], %s1757
      %s1759 = sshll.u32 [#allocation14], 4
      %s1760 = int_to_ptr.vmem [resolvable:$true] %s1759
      %1765 = dma.vmem_to_hbm [thread:$0]  %s1760, 512, %s9, [#allocation15], 256, 256, 16
    $region65: #{tpu_custom_call.1} parent=1 // pred_fallthru
      _
    // Predicated region
    $region66: #{tpu_custom_call.1} parent=1 // pred_check
      _
    $region67: #{tpu_custom_call.1} parent=1 // pred_check_branch
      %1767 = sbr.rel (0) target = $region69
    $region68: #{tpu_custom_call.1} parent=1 // pred_region
      %1768 = dma.done [#allocation4], 16
    $region69: #{tpu_custom_call.1} parent=1 // pred_fallthru
      _
    // Predicated region
    $region70: #{tpu_custom_call.1} parent=1 // pred_check
      _
    $region71: #{tpu_custom_call.1} parent=1 // pred_check_branch
      %1770 = sbr.rel (0) target = $region73
    $region72: #{tpu_custom_call.1} parent=1 // pred_region
      %1771 = dma.done [#allocation15], 512
    $region73: #{tpu_custom_call.1} parent=1 // pred_fallthru
      _
    %1772 = vsyncpa [#allocation3], 1
    %1773 = vsyncpa [#allocation6], 1
    %1774 = vsyncpa [#allocation9], 1
    %1775 = vsyncpa [#allocation12], 1
    %1776 = vsyncpa [#allocation4], 1
    %1777 = vsyncpa [#allocation15], 1

</llo_original>
